<compile_context>
chip_gen: v6e
topology: v6e:2x2x1
jax: 0.10.0
libtpu: 0.0.40
codegen_flags: <defaults>
</compile_context>

<pallas_src>
import jax
import jax.numpy as jnp
from jax.experimental import pallas as pl
from jax.experimental.pallas import tpu as pltpu

ZNEAR = 0.1
ZFAR = 10.0
_NEG_INF = -1e30


def _round_up(x, m):
    return ((x + m - 1) // m) * m


def _vmem_limit_bytes():
    try:
        cap = int(pltpu.get_tpu_info().vmem_capacity_bytes)
    except Exception:
        cap = 64 * 1024 * 1024
    return max(32 * 1024 * 1024, min((cap * 3) // 4, 100 * 1024 * 1024))


def _rodrigues(rvec):
    """Axis-angle (B, 3) -> rotation matrices (B, 3, 3)."""
    theta = jnp.sqrt(jnp.sum(rvec * rvec, axis=-1, keepdims=True))      # (B, 1)
    safe = jnp.maximum(theta, 1e-8)
    k = rvec / safe
    kx, ky, kz = k[:, 0], k[:, 1], k[:, 2]
    zero = jnp.zeros_like(kx)
    K = jnp.stack(
        [jnp.stack([zero, -kz, ky], axis=-1),
         jnp.stack([kz, zero, -kx], axis=-1),
         jnp.stack([-ky, kx, zero], axis=-1)], axis=-2)                  # (B, 3, 3)
    I = jnp.eye(3, dtype=rvec.dtype)[None]
    s = jnp.sin(theta)[..., None]
    c = jnp.cos(theta)[..., None]
    R = I + s * K + (1.0 - c) * jnp.matmul(K, K)
    return jnp.where(theta[..., None] < 1e-8, I, R)


def _pulsar_splat_kernel(pix_ref, pp_ref, colT_ref, out_ref,
                         m_sc, den_sc, acc_sc):
    """One grid step = one (pixel tile, point chunk) pair; online softmax."""
    c = pl.program_id(3)

    @pl.when(c == 0)
    def _init():
        m_sc[...] = jnp.zeros_like(m_sc)        # background score = 0
        den_sc[...] = jnp.ones_like(den_sc)     # background weight exp(0)
        acc_sc[...] = jnp.zeros_like(acc_sc)    # background colour = 0

    px = pix_ref[0:1, :]                        # (1, P) pixel centre x
    py = pix_ref[1:2, :]                        # (1, P) pixel centre y

    pp = pp_ref[...]                            # (chunk, 8) packed attributes
    u = pp[:, 0:1]                              # projected x
    v = pp[:, 1:2]                              # projected y
    rsq = pp[:, 2:3]                            # (r_pix + 0.5)^2
    hir = pp[:, 3:4]                            # 0.5 / (r_pix + 0.5)
    sb = pp[:, 4:5]                             # score (z_norm / gamma), -inf if invalid
    op = pp[:, 5:6]                             # opacity gated by validity

    ddx = u - px                                # (chunk, P)
    ddy = v - py
    pre = rsq - (ddx * ddx + ddy * ddy)         # > 0 inside the padded sphere
    cov = jnp.clip(pre * hir, 0.0, 1.0)         # ~1px AA edge, no sqrt (VPU only)
    score = jnp.where(pre > 0.0, sb, _NEG_INF)  # keep mask: avoids exp overflow

    m = m_sc[...]
    m_new = jnp.maximum(m, jnp.max(score, axis=0, keepdims=True))
    alpha = jnp.exp(m - m_new)
    e = jnp.exp(score - m_new) * (op * cov)     # unnormalised weights (chunk, P)
    den_sc[...] = alpha * den_sc[...] + jnp.sum(e, axis=0, keepdims=True)
    acc_sc[...] = alpha * acc_sc[...] + jnp.dot(
        colT_ref[...], e.astype(jnp.bfloat16),
        preferred_element_type=jnp.float32)
    m_sc[...] = m_new

    @pl.when(c == pl.num_programs(3) - 1)
    def _finalize():
        inv_den = pl.reciprocal(jnp.maximum(den_sc[...], 1e-30), approx=False)
        out_ref[...] = (acc_sc[...] * inv_den).astype(out_ref.dtype)


def pulsar_layer_forward(pos, col, rad, rvecs, Cs, Ks, opacity=None, *,
                         height, width, gamma=1e-3, pix_tile=None,
                         point_chunk=256):
    """pos (B,N,3), col (B,N,C), rad (B,N,1), rvecs (B,3), Cs (B,3), Ks (B,3,3)."""
    n_batch, n_points, _ = pos.shape
    n_channels = col.shape[-1]
    half_w = float(width) / 2.0
    half_h = float(height) / 2.0

    # ---- cam_params packing: exactly as PulsarLayer.forward ----
    Fs = Ks[:, 0, 0]
    cxs = -(Ks[:, 0, 2] - half_w)
    cys = Ks[:, 1, 2] - half_h
    Fs_u, cxs_u, cys_u = Fs[:, None], cxs[:, None], cys[:, None]
    focal_length_px = Fs_u / float(width)
    focal_length = jnp.full((n_batch, 1), ZNEAR - 1e-5, dtype=jnp.float32)
    s = focal_length / focal_length_px
    param = jnp.concatenate([focal_length, s, cxs_u, cys_u], axis=1)
    cam_params = jnp.concatenate([Cs, rvecs, param], axis=1)        # (B, 10)

    # ---- unpack pulsar cam_params into pinhole scalars ----
    f_pix = cam_params[:, 6:7] / cam_params[:, 7:8] * float(width)   # == Fs
    pp_x = half_w - cam_params[:, 8:9]                               # == Ks[:,0,2]
    pp_y = half_h + cam_params[:, 9:10]                              # == Ks[:,1,2]
    R = _rodrigues(cam_params[:, 3:6])                               # (B, 3, 3)
    cam_C = cam_params[:, 0:3]

    if opacity is None:
        opacity = jnp.ones((n_batch, n_points), dtype=jnp.float32)
    opacity = opacity.reshape(n_batch, n_points).astype(jnp.float32)

    # ---- point chunking / padding (chunk multiple of 128 when streaming) ----
    if n_points <= int(point_chunk):
        chunk = _round_up(n_points, 8)
        n_pad = chunk
    else:
        chunk = _round_up(int(point_chunk), 128)
        n_pad = _round_up(n_points, chunk)
    n_chunks = n_pad // chunk
    pad_n = n_pad - n_points

    pos_p = jnp.pad(pos.astype(jnp.float32), ((0, 0), (0, pad_n), (0, 0)))
    rad_p = jnp.pad(rad[..., 0].astype(jnp.float32), ((0, 0), (0, pad_n)))
    opa_p = jnp.pad(opacity, ((0, 0), (0, pad_n)))
    valid_p = jnp.pad(jnp.ones((n_batch, n_points), bool), ((0, 0), (0, pad_n)))

    # ---- projection hoisted to plain JAX (lane-dense, runs once) ----
    d = pos_p - cam_C[:, None, :]                                     # (B, Np, 3)
    pc = jnp.einsum('bij,bnj->bni', R, d)                             # camera frame
    xc, yc, zc = pc[..., 0], pc[..., 1], pc[..., 2]
    inv_z = 1.0 / jnp.where(jnp.abs(zc) < 1e-8, 1e-8, zc)
    valid = (zc > ZNEAR) & (zc < ZFAR) & valid_p
    z_norm = jnp.clip((ZFAR - zc) * (1.0 / (ZFAR - ZNEAR)), 0.0, 1.0)
    u = f_pix * xc * inv_z + pp_x                                     # pixel x
    v = f_pix * yc * inv_z + pp_y                                     # pixel y
    rp5 = jnp.abs(f_pix * rad_p * inv_z) + 0.5                        # r_pix + 0.5
    rsq = rp5 * rp5
    hir = 0.5 / rp5                                                   # rp5 >= 0.5
    sb = jnp.where(valid, z_norm * (1.0 / float(gamma)), _NEG_INF)
    op = jnp.where(valid, opa_p, 0.0)
    zero = jnp.zeros_like(u)
    pts_proj = jnp.stack([u, v, rsq, hir, sb, op, zero, zero],
                         axis=-1).astype(jnp.float32)                 # (B, Np, 8)

    colT = jnp.transpose(col, (0, 2, 1)).astype(jnp.bfloat16)         # (B, C, N)
    colT = jnp.pad(colT, ((0, 0), (0, 0), (0, pad_n)))

    # ---- lane-dense pixel coordinates, padded to whole tiles ----
    n_pix = int(height) * int(width)
    if pix_tile is None:
        pix_tile = 2048 if n_pix >= 2048 else _round_up(n_pix, 128)
    pix_tile = int(pix_tile)
    n_tiles = -(-n_pix // pix_tile)
    if n_batch == 1 and n_tiles >= 2:
        n_tiles = _round_up(n_tiles, 2)     # guarantee both v7x cores get work
        n_outer = 2
    else:
        n_outer = 1
    n_inner = n_tiles // n_outer
    n_pix_pad = n_tiles * pix_tile

    lin = jnp.minimum(jnp.arange(n_pix_pad, dtype=jnp.int32), n_pix - 1)
    row = lin // int(width)
    colp = lin - row * int(width)
    pix = jnp.stack([colp.astype(jnp.float32) + 0.5,
                     row.astype(jnp.float32) + 0.5], axis=0)          # (2, n_pix_pad)

    # ---- grid: (batch, outer pixel tiles, inner pixel tiles, point chunks) ----
    out = pl.pallas_call(
        _pulsar_splat_kernel,
        out_shape=jax.ShapeDtypeStruct((n_batch, n_channels, n_pix_pad),
                                       jnp.float32),
        grid=(n_batch, n_outer, n_inner, n_chunks),
        in_specs=[
            pl.BlockSpec((2, pix_tile),
                         lambda b, to, ti, c: (0, to * n_inner + ti)),   # pix
            pl.BlockSpec((None, chunk, 8),
                         lambda b, to, ti, c: (b, c, 0)),                # pts_proj
            pl.BlockSpec((None, n_channels, chunk),
                         lambda b, to, ti, c: (b, 0, c)),                # colT (bf16)
        ],
        out_specs=pl.BlockSpec((None, n_channels, pix_tile),
                               lambda b, to, ti, c: (b, 0, to * n_inner + ti)),
        scratch_shapes=[
            pltpu.VMEM((1, pix_tile), jnp.float32),            # running max m
            pltpu.VMEM((1, pix_tile), jnp.float32),            # running denominator
            pltpu.VMEM((n_channels, pix_tile), jnp.float32),   # unnormalised colour
        ],
        compiler_params=pltpu.CompilerParams(
            dimension_semantics=("parallel", "parallel", "arbitrary", "arbitrary"),
            vmem_limit_bytes=_vmem_limit_bytes()),
    )(pix, pts_proj, colT)

    img = out[:, :, :n_pix].reshape(n_batch, n_channels, int(height), int(width))
    img = jnp.transpose(img, (0, 2, 3, 1))        # (B, H, W, C) as pulsar returns
    img = jnp.flip(img, axis=1)                   # torch.flip(img, [1])
    return img


if __name__ == "__main__":
    key = jax.random.PRNGKey(0)
    B, N, C, H, W = 2, 300, 3, 16, 16            # N > 256 exercises multi-chunk path
    k1, k2, k3, k4, k5 = jax.random.split(key, 5)

    xy = jax.random.uniform(k1, (B, N, 2), minval=-1.0, maxval=1.0)
    z = jax.random.uniform(k2, (B, N, 1), minval=2.0, maxval=6.0)
    pos = jnp.concatenate([xy, z], axis=-1).astype(jnp.float32)            # (B,N,3)
    col = jax.random.uniform(k3, (B, N, C)).astype(jnp.float32)            # (B,N,3)
    rad = jax.random.uniform(k4, (B, N, 1), minval=0.05, maxval=0.2
                             ).astype(jnp.float32)                         # (B,N,1)
    rvecs = (0.05 * jax.random.normal(k5, (B, 3))).astype(jnp.float32)     # (B,3)
    Cs = jnp.zeros((B, 3), jnp.float32)                                    # (B,3)
    f = 20.0
    Ks = jnp.tile(jnp.array([[f, 0.0, W / 2.0],
                             [0.0, f, H / 2.0],
                             [0.0, 0.0, 1.0]], jnp.float32)[None],
                  (B, 1, 1))                                               # (B,3,3)

    img = pulsar_layer_forward(pos, col, rad, rvecs, Cs, Ks,
                               height=H, width=W, gamma=1e-3)
    img = jax.block_until_ready(img)
    assert img.shape == (B, H, W, C), img.shape
    assert bool(jnp.all(jnp.isfinite(img)))
    print("KERNEL_OK")
</pallas_src>

<mosaic_0001>
module attributes {stable_mosaic.version = 11 : i64} {
  func.func @_pulsar_splat_kernel(%arg0: i32, %arg1: i32, %arg2: i32, %arg3: i32, %arg4: memref<2x256xf32, #tpu.memory_space<vmem>>, %arg5: memref<1x256x8xf32, #tpu.memory_space<vmem>>, %arg6: memref<1x3x256xbf16, #tpu.memory_space<vmem>>, %arg7: memref<1x3x256xf32, #tpu.memory_space<vmem>>, %arg8: memref<1x256xf32, #tpu.memory_space<vmem>>, %arg9: memref<1x256xf32, #tpu.memory_space<vmem>>, %arg10: memref<3x256xf32, #tpu.memory_space<vmem>>) attributes {dimension_semantics = [#tpu.dimension_semantics<parallel>, #tpu.dimension_semantics<parallel>, #tpu.dimension_semantics<arbitrary>, #tpu.dimension_semantics<arbitrary>], iteration_bounds = array<i64: 2, 1, 1, 2>, scalar_prefetch = 0 : i64, scratch_operands = 3 : i64, tpu.core_type = #tpu.core_type<tc>, window_params = [{transform_indices = @transform_0, window_bounds = array<i64: 2, 256>}, {transform_indices = @transform_1, window_bounds = array<i64: 1, 256, 8>}, {transform_indices = @transform_2, window_bounds = array<i64: 1, 3, 256>}, {transform_indices = @transform_3, window_bounds = array<i64: 1, 3, 256>}]} {
    %c0_i32 = arith.constant 0 : i32
    %0 = arith.cmpi eq, %arg3, %c0_i32 : i32
    %1 = arith.extui %0 : i1 to i32
    %c0_i32_0 = arith.constant 0 : i32
    %2 = arith.cmpi ne, %1, %c0_i32_0 : i32
    scf.if %2 {
      %cst_28 = arith.constant 0.000000e+00 : f32
      %67 = vector.broadcast %cst_28 : f32 to vector<1x256xf32>
      %c0_29 = arith.constant 0 : index
      %c0_30 = arith.constant 0 : index
      %68 = vector.load %arg8[%c0_29, %c0_30] : memref<1x256xf32, #tpu.memory_space<vmem>>, vector<1x256xf32>
      tpu.vector_store %arg8[%c0_29, %c0_30], %67 {strides = array<i32>} : memref<1x256xf32, #tpu.memory_space<vmem>>, vector<1x256xf32>,
      %cst_31 = arith.constant 1.000000e+00 : f32
      %69 = vector.broadcast %cst_31 : f32 to vector<1x256xf32>
      %c0_32 = arith.constant 0 : index
      %c0_33 = arith.constant 0 : index
      %70 = vector.load %arg9[%c0_32, %c0_33] : memref<1x256xf32, #tpu.memory_space<vmem>>, vector<1x256xf32>
      tpu.vector_store %arg9[%c0_32, %c0_33], %69 {strides = array<i32>} : memref<1x256xf32, #tpu.memory_space<vmem>>, vector<1x256xf32>,
      %cst_34 = arith.constant 0.000000e+00 : f32
      %71 = vector.broadcast %cst_34 : f32 to vector<3x256xf32>
      %c0_35 = arith.constant 0 : index
      %c0_36 = arith.constant 0 : index
      %72 = vector.load %arg10[%c0_35, %c0_36] : memref<3x256xf32, #tpu.memory_space<vmem>>, vector<3x256xf32>
      tpu.vector_store %arg10[%c0_35, %c0_36], %71 {strides = array<i32>} : memref<3x256xf32, #tpu.memory_space<vmem>>, vector<3x256xf32>,
    } else {
    }
    %c0 = arith.constant 0 : index
    %c0_1 = arith.constant 0 : index
    %3 = vector.load %arg4[%c0, %c0_1] : memref<2x256xf32, #tpu.memory_space<vmem>>, vector<1x256xf32>
    %c1 = arith.constant 1 : index
    %c0_2 = arith.constant 0 : index
    %4 = vector.load %arg4[%c1, %c0_2] : memref<2x256xf32, #tpu.memory_space<vmem>>, vector<1x256xf32>
    %c0_3 = arith.constant 0 : index
    %c0_4 = arith.constant 0 : index
    %c0_5 = arith.constant 0 : index
    %5 = vector.load %arg5[%c0_3, %c0_4, %c0_5] : memref<1x256x8xf32, #tpu.memory_space<vmem>>, vector<1x256x8xf32>
    %6 = vector.shape_cast %5 : vector<1x256x8xf32> to vector<256x8xf32>
    %7 = vector.extract_strided_slice %6 {offsets = [0, 0], sizes = [256, 1], strides = [1, 1]} : vector<256x8xf32> to vector<256x1xf32>
    %8 = vector.extract_strided_slice %6 {offsets = [0, 1], sizes = [256, 1], strides = [1, 1]} : vector<256x8xf32> to vector<256x1xf32>
    %9 = vector.extract_strided_slice %6 {offsets = [0, 2], sizes = [256, 1], strides = [1, 1]} : vector<256x8xf32> to vector<256x1xf32>
    %10 = vector.extract_strided_slice %6 {offsets = [0, 3], sizes = [256, 1], strides = [1, 1]} : vector<256x8xf32> to vector<256x1xf32>
    %11 = vector.extract_strided_slice %6 {offsets = [0, 4], sizes = [256, 1], strides = [1, 1]} : vector<256x8xf32> to vector<256x1xf32>
    %12 = vector.extract_strided_slice %6 {offsets = [0, 5], sizes = [256, 1], strides = [1, 1]} : vector<256x8xf32> to vector<256x1xf32>
    %13 = vector.broadcast %7 : vector<256x1xf32> to vector<256x256xf32>
    %14 = vector.broadcast %3 : vector<1x256xf32> to vector<256x256xf32>
    %15 = arith.subf %13, %14 : vector<256x256xf32>
    %16 = vector.broadcast %8 : vector<256x1xf32> to vector<256x256xf32>
    %17 = vector.broadcast %4 : vector<1x256xf32> to vector<256x256xf32>
    %18 = arith.subf %16, %17 : vector<256x256xf32>
    %19 = arith.mulf %15, %15 : vector<256x256xf32>
    %20 = arith.mulf %18, %18 : vector<256x256xf32>
    %21 = arith.addf %19, %20 : vector<256x256xf32>
    %22 = vector.broadcast %9 : vector<256x1xf32> to vector<256x256xf32>
    %23 = arith.subf %22, %21 : vector<256x256xf32>
    %24 = vector.broadcast %10 : vector<256x1xf32> to vector<256x256xf32>
    %25 = arith.mulf %23, %24 : vector<256x256xf32>
    %cst = arith.constant 0.000000e+00 : f32
    %cst_6 = arith.constant 1.000000e+00 : f32
    %26 = vector.broadcast %cst : f32 to vector<256x256xf32>
    %27 = arith.maximumf %26, %25 : vector<256x256xf32>
    %28 = vector.broadcast %cst_6 : f32 to vector<256x256xf32>
    %29 = arith.minimumf %28, %27 : vector<256x256xf32>
    %cst_7 = arith.constant 0.000000e+00 : f32
    %30 = vector.broadcast %cst_7 : f32 to vector<256x256xf32>
    %31 = arith.cmpf ogt, %23, %30 : vector<256x256xf32>
    %cst_8 = arith.constant -1.000000e+30 : f32
    %32 = vector.shape_cast %11 : vector<256x1xf32> to vector<256x1xf32>
    %33 = vector.broadcast %32 : vector<256x1xf32> to vector<256x256xf32>
    %34 = vector.broadcast %cst_8 : f32 to vector<256x256xf32>
    %35 = arith.select %31, %33, %34 : vector<256x256xi1>, vector<256x256xf32>
    %c0_9 = arith.constant 0 : index
    %c0_10 = arith.constant 0 : index
    %36 = vector.load %arg8[%c0_9, %c0_10] : memref<1x256xf32, #tpu.memory_space<vmem>>, vector<1x256xf32>
    %cst_11 = arith.constant dense<0xFF800000> : vector<256xf32>
    %37 = vector.multi_reduction <maximumf>, %35, %cst_11 [0] : vector<256x256xf32> to vector<256xf32>
    %38 = vector.shape_cast %37 : vector<256xf32> to vector<1x256xf32>
    %39 = arith.maximumf %36, %38 : vector<1x256xf32>
    %40 = arith.subf %36, %39 : vector<1x256xf32>
    %41 = math.exp %40 : vector<1x256xf32>
    %42 = vector.broadcast %39 : vector<1x256xf32> to vector<256x256xf32>
    %43 = arith.subf %35, %42 : vector<256x256xf32>
    %44 = math.exp %43 : vector<256x256xf32>
    %45 = vector.broadcast %12 : vector<256x1xf32> to vector<256x256xf32>
    %46 = arith.mulf %45, %29 : vector<256x256xf32>
    %47 = arith.mulf %44, %46 : vector<256x256xf32>
    %c0_12 = arith.constant 0 : index
    %c0_13 = arith.constant 0 : index
    %48 = vector.load %arg9[%c0_12, %c0_13] : memref<1x256xf32, #tpu.memory_space<vmem>>, vector<1x256xf32>
    %49 = arith.mulf %41, %48 : vector<1x256xf32>
    %cst_14 = arith.constant dense<0.000000e+00> : vector<256xf32>
    %50 = vector.multi_reduction <add>, %47, %cst_14 [0] : vector<256x256xf32> to vector<256xf32>
    %51 = vector.shape_cast %50 : vector<256xf32> to vector<1x256xf32>
    %52 = arith.addf %49, %51 : vector<1x256xf32>
    %c0_15 = arith.constant 0 : index
    %c0_16 = arith.constant 0 : index
    %53 = vector.load %arg9[%c0_15, %c0_16] : memref<1x256xf32, #tpu.memory_space<vmem>>, vector<1x256xf32>
    tpu.vector_store %arg9[%c0_15, %c0_16], %52 {strides = array<i32>} : memref<1x256xf32, #tpu.memory_space<vmem>>, vector<1x256xf32>,
    %c0_17 = arith.constant 0 : index
    %c0_18 = arith.constant 0 : index
    %54 = vector.load %arg10[%c0_17, %c0_18] : memref<3x256xf32, #tpu.memory_space<vmem>>, vector<3x256xf32>
    %55 = vector.broadcast %41 : vector<1x256xf32> to vector<3x256xf32>
    %56 = arith.mulf %55, %54 : vector<3x256xf32>
    %c0_19 = arith.constant 0 : index
    %c0_20 = arith.constant 0 : index
    %c0_21 = arith.constant 0 : index
    %57 = vector.load %arg6[%c0_19, %c0_20, %c0_21] : memref<1x3x256xbf16, #tpu.memory_space<vmem>>, vector<1x3x256xbf16>
    %58 = vector.shape_cast %57 : vector<1x3x256xbf16> to vector<3x256xbf16>
    %59 = arith.truncf %47 : vector<256x256xf32> to vector<256x256xbf16>
    %cst_22 = arith.constant dense<0.000000e+00> : vector<3x256xf32>
    %60 = tpu.matmul %58, %59, %cst_22 {dimension_numbers = #tpu.dot_dimension_numbers<[1], [0], [0], [1], [0, 0, 1, 1], [], []>} : vector<3x256xbf16>, vector<256x256xbf16>, vector<3x256xf32> -> vector<3x256xf32>
    %61 = arith.addf %56, %60 : vector<3x256xf32>
    %c0_23 = arith.constant 0 : index
    %c0_24 = arith.constant 0 : index
    %62 = vector.load %arg10[%c0_23, %c0_24] : memref<3x256xf32, #tpu.memory_space<vmem>>, vector<3x256xf32>
    tpu.vector_store %arg10[%c0_23, %c0_24], %61 {strides = array<i32>} : memref<3x256xf32, #tpu.memory_space<vmem>>, vector<3x256xf32>,
    %c0_25 = arith.constant 0 : index
    %c0_26 = arith.constant 0 : index
    %63 = vector.load %arg8[%c0_25, %c0_26] : memref<1x256xf32, #tpu.memory_space<vmem>>, vector<1x256xf32>
    tpu.vector_store %arg8[%c0_25, %c0_26], %39 {strides = array<i32>} : memref<1x256xf32, #tpu.memory_space<vmem>>, vector<1x256xf32>,
    %c1_i32 = arith.constant 1 : i32
    %64 = arith.cmpi eq, %arg3, %c1_i32 : i32
    %65 = arith.extui %64 : i1 to i32
    %c0_i32_27 = arith.constant 0 : i32
    %66 = arith.cmpi ne, %65, %c0_i32_27 : i32
    scf.if %66 {
      %c0_28 = arith.constant 0 : index
      %c0_29 = arith.constant 0 : index
      %67 = vector.load %arg9[%c0_28, %c0_29] : memref<1x256xf32, #tpu.memory_space<vmem>>, vector<1x256xf32>
      %cst_30 = arith.constant 1.000000e-30 : f32
      %68 = vector.broadcast %cst_30 : f32 to vector<1x256xf32>
      %69 = arith.maximumf %67, %68 : vector<1x256xf32>
      %70 = tpu.reciprocal %69 : vector<1x256xf32> -> vector<1x256xf32>
      %c0_31 = arith.constant 0 : index
      %c0_32 = arith.constant 0 : index
      %71 = vector.load %arg10[%c0_31, %c0_32] : memref<3x256xf32, #tpu.memory_space<vmem>>, vector<3x256xf32>
      %72 = vector.broadcast %70 : vector<1x256xf32> to vector<3x256xf32>
      %73 = arith.mulf %71, %72 : vector<3x256xf32>
      %c0_33 = arith.constant 0 : index
      %c0_34 = arith.constant 0 : index
      %c0_35 = arith.constant 0 : index
      %74 = vector.load %arg7[%c0_33, %c0_34, %c0_35] : memref<1x3x256xf32, #tpu.memory_space<vmem>>, vector<1x3x256xf32>
      %75 = vector.shape_cast %74 : vector<1x3x256xf32> to vector<3x256xf32>
      %76 = vector.shape_cast %73 : vector<3x256xf32> to vector<1x3x256xf32>
      tpu.vector_store %arg7[%c0_33, %c0_34, %c0_35], %76 {strides = array<i32>} : memref<1x3x256xf32, #tpu.memory_space<vmem>>, vector<1x3x256xf32>,
    } else {
    }
    return
  }
  func.func @transform_0(%arg0: i32, %arg1: i32, %arg2: i32, %arg3: i32) -> (i32, i32) {
    %c1_i32 = arith.constant 1 : i32
    %0 = arith.muli %arg1, %c1_i32 : i32
    %1 = arith.addi %0, %arg2 : i32
    %c0_i32 = arith.constant 0 : i32
    %c0_i32_0 = arith.constant 0 : i32
    return %c0_i32, %1 : i32, i32
  }
  func.func @transform_1(%arg0: i32, %arg1: i32, %arg2: i32, %arg3: i32) -> (i32, i32, i32) {
    %c0_i32 = arith.constant 0 : i32
    %c0_i32_0 = arith.constant 0 : i32
    return %arg0, %arg3, %c0_i32 : i32, i32, i32
  }
  func.func @transform_2(%arg0: i32, %arg1: i32, %arg2: i32, %arg3: i32) -> (i32, i32, i32) {
    %c0_i32 = arith.constant 0 : i32
    %c0_i32_0 = arith.constant 0 : i32
    return %arg0, %c0_i32, %arg3 : i32, i32, i32
  }
  func.func @transform_3(%arg0: i32, %arg1: i32, %arg2: i32, %arg3: i32) -> (i32, i32, i32) {
    %c1_i32 = arith.constant 1 : i32
    %0 = arith.muli %arg1, %c1_i32 : i32
    %1 = arith.addi %0, %arg2 : i32
    %c0_i32 = arith.constant 0 : i32
    %c0_i32_0 = arith.constant 0 : i32
    return %arg0, %c0_i32, %1 : i32, i32, i32
  }
}

</mosaic_0001>

<llo_original>
// kernel: tpu_custom_call.1
$region0: #{tpu_custom_call.1}
  #allocation0 [shape = 'u32[]', space=smem, size = 0x4, offset = 0x4, fixed_abs, tag = 'smem constant byte address 0x4 - core index']
  #allocation1 [shape = 'u32[144,128]{1,0:T(1,128)}', space=vmem, size = 0x12000, scoped, tag = 'internal scratch']
  #allocation2 [shape = 'f32[1,256]{1,0:T(1,128)}', space=vmem, size = 0x400, scoped, tag = 'scratch operand']
  #allocation3 [shape = 'f32[1,256]{1,0:T(1,128)}', space=vmem, size = 0x400, scoped, tag = 'scratch operand']
  #allocation4 [shape = 'f32[3,256]{1,0:T(4,128)}', space=vmem, size = 0x1000, scoped, tag = 'scratch operand']
  %s0 = inlined_call_operand.vmem [shape: f32[2,256], index: 0, kind: input, shape index: {}]
  %s1 = inlined_call_operand.vmem [shape: f32[2,512,8], index: 1, kind: input, shape index: {}]
  %s2 = inlined_call_operand.vmem [shape: bf16[2,3,512], index: 2, kind: input, shape index: {}]
  %s3 = inlined_call_operand.vmem [shape: f32[2,3,256], index: 3, kind: output, shape index: {}]
  %s4 = sld [smem:[#allocation0]]
  $region53: #{tpu_custom_call.1} parent=0
    _
  %s6 = ssub.s32 1, %s4
  %s7 = scalar_select 0, %s6, %s4
  loop: start=0, step=1, limit=6
  $region2: #{tpu_custom_call.1} parent=0 // loop_pre_header
    _
  $region3: #{tpu_custom_call.1} parent=0 // loop_header
    %s9 = sphi 0, %s13
    %p10 = scmp.ge.s32.totalorder %s9, 6
    %s16 = sphi 0, %s42
    %s17 = sphi 0, %s38
    %s18 = sphi 0, %s34
    %s19 = sphi 0, %s30
    %s20 = sphi 0, %s16
    %s21 = sphi 0, %s17
    %s22 = sphi 0, %s18
    %s23 = sphi 0, %s19
    %s24 = sphi 0, %s20
    %s25 = sphi 0, %s21
    %s26 = sphi 0, %s22
    %s27 = sphi 0, %s23
    %s47 = sphi 0, %s49
    %s50 = sphi 0, %s47
    %s51 = sphi 0, %s50
    %s67 = sphi 0, %s51
    %s75 = sphi 0, %s77
    %s78 = sphi 0, %s75
    %s79 = sphi 0, %s78
    %s95 = sphi 0, %s79
    %s103 = sphi 0, %s105
    %s106 = sphi 0, %s103
    %s107 = sphi 0, %s106
    %s123 = sphi 0, %s107
    %s133 = sphi 0, %s135
    %s136 = sphi 0, %s133
    %s137 = sphi 0, %s136
    %s153 = sphi 0, %s137
  $region4: #{tpu_custom_call.1} parent=0 // loop_header_branch
    %12 = sbr.rel (%p10) target = $region8
  $region5: #{tpu_custom_call.1} parent=0 // loop_body
    %s14 = ssub.s32 %s9, 1
    %s15 = ssub.s32 %s9, 2
    %s28 = sadd.s32 1, %s19
    %p29 = scmp.ge.s32.totalorder %s28, 2
    %s30 = scalar_select %p29, 0, %s28
    %s31 = sadd.s32 1, %s18
    %s32 = scalar_select %p29, %s31, %s18
    %p33 = scmp.ge.s32.totalorder %s32, 1
    %s34 = scalar_select %p33, 0, %s32
    %s35 = sadd.s32 1, %s17
    %s36 = scalar_select %p33, %s35, %s17
    %p37 = scmp.ge.s32.totalorder %s36, 1
    %s38 = scalar_select %p37, 0, %s36
    %s39 = sadd.s32 1, %s16
    %s40 = scalar_select %p37, %s39, %s16
    %p41 = scmp.ge.s32.totalorder %s40, 2
    %s42 = scalar_select %p41, 0, %s40
    %s43 = sadd.s32 %s17, %s18
    %s44 = sadd.s32 %s38, %s34
    %s45 = ssub.s32 %s43, %s44
    %p46 = scmp.eq.s32.totalorder %s45, 0
    %s48 = sadd.s32 %s47, 1
    %s49 = scalar_select %p46, %s47, %s48
    %p52 = pneg %p46
    %p53 = scmp.eq.s32.totalorder %s9, 3
    %p54 = por %p52, %p53
    %p55 = scmp.ne.s32.totalorder %s47, %s50
    %p56 = scmp.eq.s32.totalorder %s9, 0
    %p57 = por %p55, %p56
    %p58 = scmp.ne.s32.totalorder %s47, %s50
    %p59 = scmp.eq.s32.totalorder %s14, 3
    %p60 = por %p58, %p59
    %p61 = scmp.ne.s32.totalorder %s50, %s51
    %p62 = scmp.eq.s32.totalorder %s14, 0
    %p63 = por %p61, %p62
    %p64 = scmp.ne.s32.totalorder %s50, %s51
    %p65 = scmp.eq.s32.totalorder %s15, 3
    %p66 = por %p64, %p65
    %p68 = scmp.ne.s32.totalorder %s51, %s67
    %p69 = scmp.eq.s32.totalorder %s15, 0
    %p70 = por %p68, %p69
    %s71 = ssub.s32 %s16, %s42
    %s72 = ssub.s32 %s19, %s30
    %s73 = sor.u32 %s71, %s72
    %p74 = scmp.eq.s32.totalorder %s73, 0
    %s76 = sadd.s32 %s75, 1
    %s77 = scalar_select %p74, %s75, %s76
    %p80 = pneg %p74
    %p81 = scmp.eq.s32.totalorder %s9, 3
    %p82 = por %p80, %p81
    %p83 = scmp.ne.s32.totalorder %s75, %s78
    %p84 = scmp.eq.s32.totalorder %s9, 0
    %p85 = por %p83, %p84
    %p86 = scmp.ne.s32.totalorder %s75, %s78
    %p87 = scmp.eq.s32.totalorder %s14, 3
    %p88 = por %p86, %p87
    %p89 = scmp.ne.s32.totalorder %s78, %s79
    %p90 = scmp.eq.s32.totalorder %s14, 0
    %p91 = por %p89, %p90
    %p92 = scmp.ne.s32.totalorder %s78, %s79
    %p93 = scmp.eq.s32.totalorder %s15, 3
    %p94 = por %p92, %p93
    %p96 = scmp.ne.s32.totalorder %s79, %s95
    %p97 = scmp.eq.s32.totalorder %s15, 0
    %p98 = por %p96, %p97
    %s99 = ssub.s32 %s16, %s42
    %s100 = ssub.s32 %s19, %s30
    %s101 = sor.u32 %s99, %s100
    %p102 = scmp.eq.s32.totalorder %s101, 0
    %s104 = sadd.s32 %s103, 1
    %s105 = scalar_select %p102, %s103, %s104
    %p108 = pneg %p102
    %p109 = scmp.eq.s32.totalorder %s9, 3
    %p110 = por %p108, %p109
    %p111 = scmp.ne.s32.totalorder %s103, %s106
    %p112 = scmp.eq.s32.totalorder %s9, 0
    %p113 = por %p111, %p112
    %p114 = scmp.ne.s32.totalorder %s103, %s106
    %p115 = scmp.eq.s32.totalorder %s14, 3
    %p116 = por %p114, %p115
    %p117 = scmp.ne.s32.totalorder %s106, %s107
    %p118 = scmp.eq.s32.totalorder %s14, 0
    %p119 = por %p117, %p118
    %p120 = scmp.ne.s32.totalorder %s106, %s107
    %p121 = scmp.eq.s32.totalorder %s15, 3
    %p122 = por %p120, %p121
    %p124 = scmp.ne.s32.totalorder %s107, %s123
    %p125 = scmp.eq.s32.totalorder %s15, 0
    %p126 = por %p124, %p125
    %s127 = sadd.s32 %s17, %s18
    %s128 = sadd.s32 %s38, %s34
    %s129 = ssub.s32 %s16, %s42
    %s130 = ssub.s32 %s127, %s128
    %s131 = sor.u32 %s129, %s130
    %p132 = scmp.eq.s32.totalorder %s131, 0
    %s134 = sadd.s32 %s133, 1
    %s135 = scalar_select %p132, %s133, %s134
    %p138 = pneg %p132
    %p139 = scmp.eq.s32.totalorder %s9, 3
    %p140 = por %p138, %p139
    %p141 = scmp.ne.s32.totalorder %s133, %s136
    %p142 = scmp.eq.s32.totalorder %s9, 0
    %p143 = por %p141, %p142
    %p144 = scmp.ne.s32.totalorder %s133, %s136
    %p145 = scmp.eq.s32.totalorder %s14, 3
    %p146 = por %p144, %p145
    %p147 = scmp.ne.s32.totalorder %s136, %s137
    %p148 = scmp.eq.s32.totalorder %s14, 0
    %p149 = por %p147, %p148
    %p150 = scmp.ne.s32.totalorder %s136, %s137
    %p151 = scmp.eq.s32.totalorder %s15, 3
    %p152 = por %p150, %p151
    %p154 = scmp.ne.s32.totalorder %s137, %s153
    %p155 = scmp.eq.s32.totalorder %s15, 0
    %p156 = por %p154, %p155
    %p157 = scmp.le.s32.totalorder 1, %s9
    %p158 = scmp.lt.s32.totalorder %s9, 5
    %p159 = pnand %p157, %p158
    %p160 = pneg %p159
    // Predicated region
    $region9: #{tpu_custom_call.1} parent=5 // pred_check
      _
    $region10: #{tpu_custom_call.1} parent=5 // pred_check_branch
      %162 = sbr.rel (%p159) target = $region12
    $region11: #{tpu_custom_call.1} parent=5 // pred_region
      %s163 = ssub.s32 %s9, 1
      // Predicated region
      $region13: #{tpu_custom_call.1} parent=11 // pred_check
        %p164 = pneg %p63
      $region14: #{tpu_custom_call.1} parent=11 // pred_check_branch
        %166 = sbr.rel (%p164) target = $region16
      $region15: #{tpu_custom_call.1} parent=11 // pred_region
        %s167 = sadd.s32 %s21, %s22
        %s168 = smul.u32 2, %s167
        %p169 = scmp.lt.s32.totalorder %s168, 1
        %s170 = scalar_select %p169, %s168, 1
        %s171 = smul.addr %s170, 2
        %s172 = scalar_lea.vmem %s0, %s171
        %s173 = sadd.s32 %s21, %s22
        %s174 = smul.u32 2, %s173
      $region16: #{tpu_custom_call.1} parent=11 // pred_fallthru
        _
    $region12: #{tpu_custom_call.1} parent=5 // pred_fallthru
      _
    %p175 = scmp.lt.s32.totalorder %s9, 4
    // Predicated region
    $region17: #{tpu_custom_call.1} parent=5 // pred_check
      %p176 = pneg %p175
    $region18: #{tpu_custom_call.1} parent=5 // pred_check_branch
      %178 = sbr.rel (%p176) target = $region20
    $region19: #{tpu_custom_call.1} parent=5 // pred_region
      // Predicated region
      $region21: #{tpu_custom_call.1} parent=19 // pred_check
        %p179 = pneg %p85
      $region22: #{tpu_custom_call.1} parent=19 // pred_check_branch
        %181 = sbr.rel (%p179) target = $region24
      $region23: #{tpu_custom_call.1} parent=19 // pred_region
        %s182 = smul.u32 32, %s19
        %p183 = scmp.lt.s32.totalorder %s16, 1
        %s184 = scalar_select %p183, %s16, 1
        %p185 = scmp.lt.s32.totalorder %s182, 63
        %s186 = scalar_select %p185, %s182, 63
        %s187 = smul.addr %s184, 64
        %s188 = sadd.s32 %s186, %s187
        %s189 = smul.addr %s188, 8
        %s190 = scalar_lea.vmem %s1, %s189
        %s191 = smul.u32 32, %s19
      $region24: #{tpu_custom_call.1} parent=19 // pred_fallthru
        _
      // Predicated region
      $region25: #{tpu_custom_call.1} parent=19 // pred_check
        %p192 = pneg %p113
      $region26: #{tpu_custom_call.1} parent=19 // pred_check_branch
        %194 = sbr.rel (%p192) target = $region28
      $region27: #{tpu_custom_call.1} parent=19 // pred_region
        %s195 = smul.u32 2, %s19
        %p196 = scmp.lt.s32.totalorder %s16, 1
        %s197 = scalar_select %p196, %s16, 1
        %p198 = scmp.lt.s32.totalorder %s195, 3
        %s199 = scalar_select %p198, %s195, 3
        %s200 = smul.addr %s197, 4
        %s201 = sadd.s32 %s199, %s200
        %s202 = smul.addr %s201, 2
        %s203 = scalar_lea.vmem %s2, %s202
        %s204 = smul.u32 2, %s19
      $region28: #{tpu_custom_call.1} parent=19 // pred_fallthru
        _
    $region20: #{tpu_custom_call.1} parent=5 // pred_fallthru
      _
    %p205 = scmp.le.s32.totalorder 1, %s9
    %p206 = scmp.lt.s32.totalorder %s9, 5
    %p207 = pnand %p205, %p206
    %p208 = pneg %p207
    // Predicated region
    $region29: #{tpu_custom_call.1} parent=5 // pred_check
      _
    $region30: #{tpu_custom_call.1} parent=5 // pred_check_branch
      %210 = sbr.rel (%p207) target = $region32
    $region31: #{tpu_custom_call.1} parent=5 // pred_region
      %s211 = ssub.s32 %s9, 1
      %s212 = sadd.s32 %s21, %s22
      %s213 = smul.u32 2, %s212
      %p214 = scmp.lt.s32.totalorder %s213, 1
      %s215 = scalar_select %p214, %s213, 1
      %s216 = smul.addr %s215, 2
      %s217 = scalar_lea.vmem %s0, %s216
      %p218 = pneg %p63
      %p219 = pneg %p60
      %s220 = smul.u32 32, %s23
      %p221 = scmp.lt.s32.totalorder %s20, 1
      %s222 = scalar_select %p221, %s20, 1
      %p223 = scmp.lt.s32.totalorder %s220, 63
      %s224 = scalar_select %p223, %s220, 63
      %s225 = smul.addr %s222, 64
      %s226 = sadd.s32 %s224, %s225
      %s227 = smul.addr %s226, 8
      %s228 = scalar_lea.vmem %s1, %s227
      %p229 = pneg %p91
      %p230 = pneg %p88
      %s231 = smul.u32 2, %s23
      %p232 = scmp.lt.s32.totalorder %s20, 1
      %s233 = scalar_select %p232, %s20, 1
      %p234 = scmp.lt.s32.totalorder %s231, 3
      %s235 = scalar_select %p234, %s231, 3
      %s236 = smul.addr %s233, 4
      %s237 = sadd.s32 %s235, %s236
      %s238 = smul.addr %s237, 2
      %s239 = scalar_lea.vmem %s2, %s238
      %p240 = pneg %p119
      %p241 = pneg %p116
      %p242 = pneg %p149
      %p243 = pneg %p146
      %s244 = sadd.s32 %s21, %s22
      %s245 = smul.u32 2, %s244
      %p246 = scmp.lt.s32.totalorder %s20, 1
      %s247 = scalar_select %p246, %s20, 1
      %p248 = scmp.lt.s32.totalorder %s245, 1
      %s249 = scalar_select %p248, %s245, 1
      %s250 = smul.addr %s247, 2
      %s251 = sadd.s32 %s249, %s250
      %s252 = smul.addr %s251, 4
      %s253 = scalar_lea.vmem %s3, %s252
      %s254 = sadd.s32 %s21, %s22
      %s255 = smul.u32 2, %s254
      %p256 = scmp.lt.s32.totalorder %s255, 1
      %s257 = scalar_select %p256, %s255, 1
      %s258 = smul.addr %s257, 2
      %s259 = scalar_lea.vmem %s0, %s258
      %s260 = sadd.s32 %s21, %s22
      %s261 = smul.u32 2, %s260
      %s262 = smul.u32 32, %s23
      %p263 = scmp.lt.s32.totalorder %s20, 1
      %s264 = scalar_select %p263, %s20, 1
      %p265 = scmp.lt.s32.totalorder %s262, 63
      %s266 = scalar_select %p265, %s262, 63
      %s267 = smul.addr %s264, 64
      %s268 = sadd.s32 %s266, %s267
      %s269 = smul.addr %s268, 8
      %s270 = scalar_lea.vmem %s1, %s269
      %s271 = smul.u32 32, %s23
      %s272 = smul.u32 2, %s23
      %p273 = scmp.lt.s32.totalorder %s20, 1
      %s274 = scalar_select %p273, %s20, 1
      %p275 = scmp.lt.s32.totalorder %s272, 3
      %s276 = scalar_select %p275, %s272, 3
      %s277 = smul.addr %s274, 4
      %s278 = sadd.s32 %s276, %s277
      %s279 = smul.addr %s278, 2
      %s280 = scalar_lea.vmem %s2, %s279
      %s281 = smul.u32 2, %s23
      %s282 = sadd.s32 %s21, %s22
      %s283 = smul.u32 2, %s282
      %p284 = scmp.lt.s32.totalorder %s20, 1
      %s285 = scalar_select %p284, %s20, 1
      %p286 = scmp.lt.s32.totalorder %s283, 1
      %s287 = scalar_select %p286, %s283, 1
      %s288 = smul.addr %s285, 2
      %s289 = sadd.s32 %s287, %s288
      %s290 = smul.addr %s289, 4
      %s291 = scalar_lea.vmem %s3, %s290
      %s292 = sadd.s32 %s21, %s22
      %s293 = smul.u32 2, %s292
      %p294 = scmp.eq.s32.totalorder %s23, 0
      // Predicated region
      $region33: #{tpu_custom_call.1} parent=31 // pred_check
        %p295 = pneg %p294
      $region34: #{tpu_custom_call.1} parent=31 // pred_check_branch
        %297 = sbr.rel (%p295) target = $region36
      $region35: #{tpu_custom_call.1} parent=31 // pred_region
        %v298 = vlaneseq
        %vm299 = vcmp.ge.s32.totalorder %v298, 0
        %vm300 = vcmp.lt.s32.totalorder %v298, 256
        %vm301 = vmand %vm299, %vm300
        %302 = vst.msk [vmem:[#allocation2] sm:$0x3] %vm301, 0.0
        %303 = vst.msk [vmem:[#allocation3] sm:$0x3] %vm301, 1.0
        %304 = vst [vmem:[#allocation4] sm:$0x77] 0.0
      $region36: #{tpu_custom_call.1} parent=31 // pred_fallthru
        _
      %v305 = vld [vmem:[%s259] ss:$2 sm:$0x3]
      %s306 = scalar_lea.vmem %s259, 1
      %v307 = vld [vmem:[%s306] ss:$2 sm:$0x3]
      %v308 = vld [vmem:[%s270] sm:$0xff]
      %v309 = vld [vmem:[%s270 + $0x8] sm:$0xff]
      %v310 = vld [vmem:[%s270 + $0x10] sm:$0xff]
      %v311 = vld [vmem:[%s270 + $0x18] sm:$0xff]
      %v312 = vld [vmem:[%s270 + $0x20] sm:$0xff]
      %v313 = vld [vmem:[%s270 + $0x28] sm:$0xff]
      %v314 = vld [vmem:[%s270 + $0x30] sm:$0xff]
      %v315 = vld [vmem:[%s270 + $0x38] sm:$0xff]
      %v316 = vld [vmem:[%s270 + $0x40] sm:$0xff]
      %v317 = vld [vmem:[%s270 + $0x48] sm:$0xff]
      %v318 = vld [vmem:[%s270 + $0x50] sm:$0xff]
      %v319 = vld [vmem:[%s270 + $0x58] sm:$0xff]
      %v320 = vld [vmem:[%s270 + $0x60] sm:$0xff]
      %v321 = vld [vmem:[%s270 + $0x68] sm:$0xff]
      %v322 = vld [vmem:[%s270 + $0x70] sm:$0xff]
      %v323 = vld [vmem:[%s270 + $0x78] sm:$0xff]
      %v324 = vld [vmem:[%s270 + $0x80] sm:$0xff]
      %v325 = vld [vmem:[%s270 + $0x88] sm:$0xff]
      %v326 = vld [vmem:[%s270 + $0x90] sm:$0xff]
      %v327 = vld [vmem:[%s270 + $0x98] sm:$0xff]
      %v328 = vld [vmem:[%s270 + $0xa0] sm:$0xff]
      %v329 = vld [vmem:[%s270 + $0xa8] sm:$0xff]
      %v330 = vld [vmem:[%s270 + $0xb0] sm:$0xff]
      %v331 = vld [vmem:[%s270 + $0xb8] sm:$0xff]
      %v332 = vld [vmem:[%s270 + $0xc0] sm:$0xff]
      %v333 = vld [vmem:[%s270 + $0xc8] sm:$0xff]
      %v334 = vld [vmem:[%s270 + $0xd0] sm:$0xff]
      %v335 = vld [vmem:[%s270 + $0xd8] sm:$0xff]
      %v336 = vld [vmem:[%s270 + $0xe0] sm:$0xff]
      %v337 = vld [vmem:[%s270 + $0xe8] sm:$0xff]
      %v338 = vld [vmem:[%s270 + $0xf0] sm:$0xff]
      %v339 = vld [vmem:[%s270 + $0xf8] sm:$0xff]
      %341 = vset.pattern.permute.xlu0 0
      %342 = vperm.xlu0 %341, %v308
      %v343 = vpop.permute.xlu0 %342
      %346 = vset.pattern.permute.xlu0 0
      %347 = vperm.xlu0 %346, %v309
      %v348 = vpop.permute.xlu0 %347
      %351 = vset.pattern.permute.xlu0 0
      %352 = vperm.xlu0 %351, %v310
      %v353 = vpop.permute.xlu0 %352
      %356 = vset.pattern.permute.xlu0 0
      %357 = vperm.xlu0 %356, %v311
      %v358 = vpop.permute.xlu0 %357
      %361 = vset.pattern.permute.xlu0 0
      %362 = vperm.xlu0 %361, %v312
      %v363 = vpop.permute.xlu0 %362
      %366 = vset.pattern.permute.xlu0 0
      %367 = vperm.xlu0 %366, %v313
      %v368 = vpop.permute.xlu0 %367
      %371 = vset.pattern.permute.xlu0 0
      %372 = vperm.xlu0 %371, %v314
      %v373 = vpop.permute.xlu0 %372
      %376 = vset.pattern.permute.xlu0 0
      %377 = vperm.xlu0 %376, %v315
      %v378 = vpop.permute.xlu0 %377
      %381 = vset.pattern.permute.xlu0 0
      %382 = vperm.xlu0 %381, %v316
      %v383 = vpop.permute.xlu0 %382
      %386 = vset.pattern.permute.xlu0 0
      %387 = vperm.xlu0 %386, %v317
      %v388 = vpop.permute.xlu0 %387
      %391 = vset.pattern.permute.xlu0 0
      %392 = vperm.xlu0 %391, %v318
      %v393 = vpop.permute.xlu0 %392
      %396 = vset.pattern.permute.xlu0 0
      %397 = vperm.xlu0 %396, %v319
      %v398 = vpop.permute.xlu0 %397
      %401 = vset.pattern.permute.xlu0 0
      %402 = vperm.xlu0 %401, %v320
      %v403 = vpop.permute.xlu0 %402
      %406 = vset.pattern.permute.xlu0 0
      %407 = vperm.xlu0 %406, %v321
      %v408 = vpop.permute.xlu0 %407
      %411 = vset.pattern.permute.xlu0 0
      %412 = vperm.xlu0 %411, %v322
      %v413 = vpop.permute.xlu0 %412
      %416 = vset.pattern.permute.xlu0 0
      %417 = vperm.xlu0 %416, %v323
      %v418 = vpop.permute.xlu0 %417
      %421 = vset.pattern.permute.xlu0 0
      %422 = vperm.xlu0 %421, %v324
      %v423 = vpop.permute.xlu0 %422
      %426 = vset.pattern.permute.xlu0 0
      %427 = vperm.xlu0 %426, %v325
      %v428 = vpop.permute.xlu0 %427
      %431 = vset.pattern.permute.xlu0 0
      %432 = vperm.xlu0 %431, %v326
      %v433 = vpop.permute.xlu0 %432
      %436 = vset.pattern.permute.xlu0 0
      %437 = vperm.xlu0 %436, %v327
      %v438 = vpop.permute.xlu0 %437
      %441 = vset.pattern.permute.xlu0 0
      %442 = vperm.xlu0 %441, %v328
      %v443 = vpop.permute.xlu0 %442
      %446 = vset.pattern.permute.xlu0 0
      %447 = vperm.xlu0 %446, %v329
      %v448 = vpop.permute.xlu0 %447
      %451 = vset.pattern.permute.xlu0 0
      %452 = vperm.xlu0 %451, %v330
      %v453 = vpop.permute.xlu0 %452
      %456 = vset.pattern.permute.xlu0 0
      %457 = vperm.xlu0 %456, %v331
      %v458 = vpop.permute.xlu0 %457
      %461 = vset.pattern.permute.xlu0 0
      %462 = vperm.xlu0 %461, %v332
      %v463 = vpop.permute.xlu0 %462
      %466 = vset.pattern.permute.xlu0 0
      %467 = vperm.xlu0 %466, %v333
      %v468 = vpop.permute.xlu0 %467
      %471 = vset.pattern.permute.xlu0 0
      %472 = vperm.xlu0 %471, %v334
      %v473 = vpop.permute.xlu0 %472
      %476 = vset.pattern.permute.xlu0 0
      %477 = vperm.xlu0 %476, %v335
      %v478 = vpop.permute.xlu0 %477
      %481 = vset.pattern.permute.xlu0 0
      %482 = vperm.xlu0 %481, %v336
      %v483 = vpop.permute.xlu0 %482
      %486 = vset.pattern.permute.xlu0 0
      %487 = vperm.xlu0 %486, %v337
      %v488 = vpop.permute.xlu0 %487
      %491 = vset.pattern.permute.xlu0 0
      %492 = vperm.xlu0 %491, %v338
      %v493 = vpop.permute.xlu0 %492
      %496 = vset.pattern.permute.xlu0 0
      %497 = vperm.xlu0 %496, %v339
      %v498 = vpop.permute.xlu0 %497
      %v501 = vlaneseq
      %v502 = vshrl.u32 %v501, 7
      %v503 = vsub.s32 0, %v502
      %v504 = vrot.slane %v305, %v503
      %v505 = vlaneseq
      %v506 = vshrl.u32 %v505, 7
      %v507 = vsub.s32 1, %v506
      %v508 = vrot.slane %v305, %v507
      %v511 = vsub.f32 %v343, %v504
      %v512 = vsub.f32 %v343, %v508
      %v513 = vsub.f32 %v348, %v504
      %v514 = vsub.f32 %v348, %v508
      %v515 = vsub.f32 %v353, %v504
      %v516 = vsub.f32 %v353, %v508
      %v517 = vsub.f32 %v358, %v504
      %v518 = vsub.f32 %v358, %v508
      %v519 = vsub.f32 %v363, %v504
      %v520 = vsub.f32 %v363, %v508
      %v521 = vsub.f32 %v368, %v504
      %v522 = vsub.f32 %v368, %v508
      %v523 = vsub.f32 %v373, %v504
      %v524 = vsub.f32 %v373, %v508
      %v525 = vsub.f32 %v378, %v504
      %v526 = vsub.f32 %v378, %v508
      %v527 = vsub.f32 %v383, %v504
      %v528 = vsub.f32 %v383, %v508
      %v529 = vsub.f32 %v388, %v504
      %v530 = vsub.f32 %v388, %v508
      %v531 = vsub.f32 %v393, %v504
      %v532 = vsub.f32 %v393, %v508
      %v533 = vsub.f32 %v398, %v504
      %v534 = vsub.f32 %v398, %v508
      %v535 = vsub.f32 %v403, %v504
      %v536 = vsub.f32 %v403, %v508
      %v537 = vsub.f32 %v408, %v504
      %v538 = vsub.f32 %v408, %v508
      %v539 = vsub.f32 %v413, %v504
      %v540 = vsub.f32 %v413, %v508
      %v541 = vsub.f32 %v418, %v504
      %v542 = vsub.f32 %v418, %v508
      %v543 = vsub.f32 %v423, %v504
      %v544 = vsub.f32 %v423, %v508
      %v545 = vsub.f32 %v428, %v504
      %v546 = vsub.f32 %v428, %v508
      %v547 = vsub.f32 %v433, %v504
      %v548 = vsub.f32 %v433, %v508
      %v549 = vsub.f32 %v438, %v504
      %v550 = vsub.f32 %v438, %v508
      %v551 = vsub.f32 %v443, %v504
      %v552 = vsub.f32 %v443, %v508
      %v553 = vsub.f32 %v448, %v504
      %v554 = vsub.f32 %v448, %v508
      %v555 = vsub.f32 %v453, %v504
      %v556 = vsub.f32 %v453, %v508
      %v557 = vsub.f32 %v458, %v504
      %v558 = vsub.f32 %v458, %v508
      %v559 = vsub.f32 %v463, %v504
      %v560 = vsub.f32 %v463, %v508
      %v561 = vsub.f32 %v468, %v504
      %v562 = vsub.f32 %v468, %v508
      %v563 = vsub.f32 %v473, %v504
      %v564 = vsub.f32 %v473, %v508
      %v565 = vsub.f32 %v478, %v504
      %v566 = vsub.f32 %v478, %v508
      %v567 = vsub.f32 %v483, %v504
      %v568 = vsub.f32 %v483, %v508
      %v569 = vsub.f32 %v488, %v504
      %v570 = vsub.f32 %v488, %v508
      %v571 = vsub.f32 %v493, %v504
      %v572 = vsub.f32 %v493, %v508
      %v573 = vsub.f32 %v498, %v504
      %v574 = vsub.f32 %v498, %v508
      %575 = vset.pattern.permute.xlu0 1
      %576 = vperm.xlu0 %575, %v308
      %v577 = vpop.permute.xlu0 %576
      %579 = vset.pattern.permute.xlu0 1
      %580 = vperm.xlu0 %579, %v309
      %v581 = vpop.permute.xlu0 %580
      %583 = vset.pattern.permute.xlu0 1
      %584 = vperm.xlu0 %583, %v310
      %v585 = vpop.permute.xlu0 %584
      %587 = vset.pattern.permute.xlu0 1
      %588 = vperm.xlu0 %587, %v311
      %v589 = vpop.permute.xlu0 %588
      %591 = vset.pattern.permute.xlu0 1
      %592 = vperm.xlu0 %591, %v312
      %v593 = vpop.permute.xlu0 %592
      %595 = vset.pattern.permute.xlu0 1
      %596 = vperm.xlu0 %595, %v313
      %v597 = vpop.permute.xlu0 %596
      %599 = vset.pattern.permute.xlu0 1
      %600 = vperm.xlu0 %599, %v314
      %v601 = vpop.permute.xlu0 %600
      %603 = vset.pattern.permute.xlu0 1
      %604 = vperm.xlu0 %603, %v315
      %v605 = vpop.permute.xlu0 %604
      %607 = vset.pattern.permute.xlu0 1
      %608 = vperm.xlu0 %607, %v316
      %v609 = vpop.permute.xlu0 %608
      %611 = vset.pattern.permute.xlu0 1
      %612 = vperm.xlu0 %611, %v317
      %v613 = vpop.permute.xlu0 %612
      %615 = vset.pattern.permute.xlu0 1
      %616 = vperm.xlu0 %615, %v318
      %v617 = vpop.permute.xlu0 %616
      %619 = vset.pattern.permute.xlu0 1
      %620 = vperm.xlu0 %619, %v319
      %v621 = vpop.permute.xlu0 %620
      %623 = vset.pattern.permute.xlu0 1
      %624 = vperm.xlu0 %623, %v320
      %v625 = vpop.permute.xlu0 %624
      %627 = vset.pattern.permute.xlu0 1
      %628 = vperm.xlu0 %627, %v321
      %v629 = vpop.permute.xlu0 %628
      %631 = vset.pattern.permute.xlu0 1
      %632 = vperm.xlu0 %631, %v322
      %v633 = vpop.permute.xlu0 %632
      %635 = vset.pattern.permute.xlu0 1
      %636 = vperm.xlu0 %635, %v323
      %v637 = vpop.permute.xlu0 %636
      %639 = vset.pattern.permute.xlu0 1
      %640 = vperm.xlu0 %639, %v324
      %v641 = vpop.permute.xlu0 %640
      %643 = vset.pattern.permute.xlu0 1
      %644 = vperm.xlu0 %643, %v325
      %v645 = vpop.permute.xlu0 %644
      %647 = vset.pattern.permute.xlu0 1
      %648 = vperm.xlu0 %647, %v326
      %v649 = vpop.permute.xlu0 %648
      %651 = vset.pattern.permute.xlu0 1
      %652 = vperm.xlu0 %651, %v327
      %v653 = vpop.permute.xlu0 %652
      %655 = vset.pattern.permute.xlu0 1
      %656 = vperm.xlu0 %655, %v328
      %v657 = vpop.permute.xlu0 %656
      %659 = vset.pattern.permute.xlu0 1
      %660 = vperm.xlu0 %659, %v329
      %v661 = vpop.permute.xlu0 %660
      %663 = vset.pattern.permute.xlu0 1
      %664 = vperm.xlu0 %663, %v330
      %v665 = vpop.permute.xlu0 %664
      %667 = vset.pattern.permute.xlu0 1
      %668 = vperm.xlu0 %667, %v331
      %v669 = vpop.permute.xlu0 %668
      %671 = vset.pattern.permute.xlu0 1
      %672 = vperm.xlu0 %671, %v332
      %v673 = vpop.permute.xlu0 %672
      %675 = vset.pattern.permute.xlu0 1
      %676 = vperm.xlu0 %675, %v333
      %v677 = vpop.permute.xlu0 %676
      %679 = vset.pattern.permute.xlu0 1
      %680 = vperm.xlu0 %679, %v334
      %v681 = vpop.permute.xlu0 %680
      %683 = vset.pattern.permute.xlu0 1
      %684 = vperm.xlu0 %683, %v335
      %v685 = vpop.permute.xlu0 %684
      %687 = vset.pattern.permute.xlu0 1
      %688 = vperm.xlu0 %687, %v336
      %v689 = vpop.permute.xlu0 %688
      %691 = vset.pattern.permute.xlu0 1
      %692 = vperm.xlu0 %691, %v337
      %v693 = vpop.permute.xlu0 %692
      %695 = vset.pattern.permute.xlu0 1
      %696 = vperm.xlu0 %695, %v338
      %v697 = vpop.permute.xlu0 %696
      %699 = vset.pattern.permute.xlu0 1
      %700 = vperm.xlu0 %699, %v339
      %v701 = vpop.permute.xlu0 %700
      %v704 = vlaneseq
      %v705 = vshrl.u32 %v704, 7
      %v706 = vsub.s32 0, %v705
      %v707 = vrot.slane %v307, %v706
      %v708 = vlaneseq
      %v709 = vshrl.u32 %v708, 7
      %v710 = vsub.s32 1, %v709
      %v711 = vrot.slane %v307, %v710
      %v714 = vsub.f32 %v577, %v707
      %v715 = vsub.f32 %v577, %v711
      %v716 = vsub.f32 %v581, %v707
      %v717 = vsub.f32 %v581, %v711
      %v718 = vsub.f32 %v585, %v707
      %v719 = vsub.f32 %v585, %v711
      %v720 = vsub.f32 %v589, %v707
      %v721 = vsub.f32 %v589, %v711
      %v722 = vsub.f32 %v593, %v707
      %v723 = vsub.f32 %v593, %v711
      %v724 = vsub.f32 %v597, %v707
      %v725 = vsub.f32 %v597, %v711
      %v726 = vsub.f32 %v601, %v707
      %v727 = vsub.f32 %v601, %v711
      %v728 = vsub.f32 %v605, %v707
      %v729 = vsub.f32 %v605, %v711
      %v730 = vsub.f32 %v609, %v707
      %v731 = vsub.f32 %v609, %v711
      %v732 = vsub.f32 %v613, %v707
      %v733 = vsub.f32 %v613, %v711
      %v734 = vsub.f32 %v617, %v707
      %v735 = vsub.f32 %v617, %v711
      %v736 = vsub.f32 %v621, %v707
      %v737 = vsub.f32 %v621, %v711
      %v738 = vsub.f32 %v625, %v707
      %v739 = vsub.f32 %v625, %v711
      %v740 = vsub.f32 %v629, %v707
      %v741 = vsub.f32 %v629, %v711
      %v742 = vsub.f32 %v633, %v707
      %v743 = vsub.f32 %v633, %v711
      %v744 = vsub.f32 %v637, %v707
      %v745 = vsub.f32 %v637, %v711
      %v746 = vsub.f32 %v641, %v707
      %v747 = vsub.f32 %v641, %v711
      %v748 = vsub.f32 %v645, %v707
      %v749 = vsub.f32 %v645, %v711
      %v750 = vsub.f32 %v649, %v707
      %v751 = vsub.f32 %v649, %v711
      %v752 = vsub.f32 %v653, %v707
      %v753 = vsub.f32 %v653, %v711
      %v754 = vsub.f32 %v657, %v707
      %v755 = vsub.f32 %v657, %v711
      %v756 = vsub.f32 %v661, %v707
      %v757 = vsub.f32 %v661, %v711
      %v758 = vsub.f32 %v665, %v707
      %v759 = vsub.f32 %v665, %v711
      %v760 = vsub.f32 %v669, %v707
      %v761 = vsub.f32 %v669, %v711
      %v762 = vsub.f32 %v673, %v707
      %v763 = vsub.f32 %v673, %v711
      %v764 = vsub.f32 %v677, %v707
      %v765 = vsub.f32 %v677, %v711
      %v766 = vsub.f32 %v681, %v707
      %v767 = vsub.f32 %v681, %v711
      %v768 = vsub.f32 %v685, %v707
      %v769 = vsub.f32 %v685, %v711
      %v770 = vsub.f32 %v689, %v707
      %v771 = vsub.f32 %v689, %v711
      %v772 = vsub.f32 %v693, %v707
      %v773 = vsub.f32 %v693, %v711
      %v774 = vsub.f32 %v697, %v707
      %v775 = vsub.f32 %v697, %v711
      %v776 = vsub.f32 %v701, %v707
      %v777 = vsub.f32 %v701, %v711
      %v778 = vmul.f32 %v511, %v511
      %v779 = vmul.f32 %v512, %v512
      %v780 = vmul.f32 %v513, %v513
      %v781 = vmul.f32 %v514, %v514
      %v782 = vmul.f32 %v515, %v515
      %v783 = vmul.f32 %v516, %v516
      %v784 = vmul.f32 %v517, %v517
      %v785 = vmul.f32 %v518, %v518
      %v786 = vmul.f32 %v519, %v519
      %v787 = vmul.f32 %v520, %v520
      %v788 = vmul.f32 %v521, %v521
      %v789 = vmul.f32 %v522, %v522
      %v790 = vmul.f32 %v523, %v523
      %v791 = vmul.f32 %v524, %v524
      %v792 = vmul.f32 %v525, %v525
      %v793 = vmul.f32 %v526, %v526
      %v794 = vmul.f32 %v527, %v527
      %v795 = vmul.f32 %v528, %v528
      %v796 = vmul.f32 %v529, %v529
      %v797 = vmul.f32 %v530, %v530
      %v798 = vmul.f32 %v531, %v531
      %v799 = vmul.f32 %v532, %v532
      %v800 = vmul.f32 %v533, %v533
      %v801 = vmul.f32 %v534, %v534
      %v802 = vmul.f32 %v535, %v535
      %v803 = vmul.f32 %v536, %v536
      %v804 = vmul.f32 %v537, %v537
      %v805 = vmul.f32 %v538, %v538
      %v806 = vmul.f32 %v539, %v539
      %v807 = vmul.f32 %v540, %v540
      %v808 = vmul.f32 %v541, %v541
      %v809 = vmul.f32 %v542, %v542
      %v810 = vmul.f32 %v543, %v543
      %v811 = vmul.f32 %v544, %v544
      %v812 = vmul.f32 %v545, %v545
      %v813 = vmul.f32 %v546, %v546
      %v814 = vmul.f32 %v547, %v547
      %v815 = vmul.f32 %v548, %v548
      %v816 = vmul.f32 %v549, %v549
      %v817 = vmul.f32 %v550, %v550
      %v818 = vmul.f32 %v551, %v551
      %v819 = vmul.f32 %v552, %v552
      %v820 = vmul.f32 %v553, %v553
      %v821 = vmul.f32 %v554, %v554
      %v822 = vmul.f32 %v555, %v555
      %v823 = vmul.f32 %v556, %v556
      %v824 = vmul.f32 %v557, %v557
      %v825 = vmul.f32 %v558, %v558
      %v826 = vmul.f32 %v559, %v559
      %v827 = vmul.f32 %v560, %v560
      %v828 = vmul.f32 %v561, %v561
      %v829 = vmul.f32 %v562, %v562
      %v830 = vmul.f32 %v563, %v563
      %v831 = vmul.f32 %v564, %v564
      %v832 = vmul.f32 %v565, %v565
      %v833 = vmul.f32 %v566, %v566
      %v834 = vmul.f32 %v567, %v567
      %v835 = vmul.f32 %v568, %v568
      %v836 = vmul.f32 %v569, %v569
      %v837 = vmul.f32 %v570, %v570
      %v838 = vmul.f32 %v571, %v571
      %v839 = vmul.f32 %v572, %v572
      %v840 = vmul.f32 %v573, %v573
      %v841 = vmul.f32 %v574, %v574
      %v842 = vmul.f32 %v714, %v714
      %v843 = vmul.f32 %v715, %v715
      %v844 = vmul.f32 %v716, %v716
      %v845 = vmul.f32 %v717, %v717
      %v846 = vmul.f32 %v718, %v718
      %v847 = vmul.f32 %v719, %v719
      %v848 = vmul.f32 %v720, %v720
      %v849 = vmul.f32 %v721, %v721
      %v850 = vmul.f32 %v722, %v722
      %v851 = vmul.f32 %v723, %v723
      %v852 = vmul.f32 %v724, %v724
      %v853 = vmul.f32 %v725, %v725
      %v854 = vmul.f32 %v726, %v726
      %v855 = vmul.f32 %v727, %v727
      %v856 = vmul.f32 %v728, %v728
      %v857 = vmul.f32 %v729, %v729
      %v858 = vmul.f32 %v730, %v730
      %v859 = vmul.f32 %v731, %v731
      %v860 = vmul.f32 %v732, %v732
      %v861 = vmul.f32 %v733, %v733
      %v862 = vmul.f32 %v734, %v734
      %v863 = vmul.f32 %v735, %v735
      %v864 = vmul.f32 %v736, %v736
      %v865 = vmul.f32 %v737, %v737
      %v866 = vmul.f32 %v738, %v738
      %v867 = vmul.f32 %v739, %v739
      %v868 = vmul.f32 %v740, %v740
      %v869 = vmul.f32 %v741, %v741
      %v870 = vmul.f32 %v742, %v742
      %v871 = vmul.f32 %v743, %v743
      %v872 = vmul.f32 %v744, %v744
      %v873 = vmul.f32 %v745, %v745
      %v874 = vmul.f32 %v746, %v746
      %v875 = vmul.f32 %v747, %v747
      %v876 = vmul.f32 %v748, %v748
      %v877 = vmul.f32 %v749, %v749
      %v878 = vmul.f32 %v750, %v750
      %v879 = vmul.f32 %v751, %v751
      %v880 = vmul.f32 %v752, %v752
      %v881 = vmul.f32 %v753, %v753
      %v882 = vmul.f32 %v754, %v754
      %v883 = vmul.f32 %v755, %v755
      %v884 = vmul.f32 %v756, %v756
      %v885 = vmul.f32 %v757, %v757
      %v886 = vmul.f32 %v758, %v758
      %v887 = vmul.f32 %v759, %v759
      %v888 = vmul.f32 %v760, %v760
      %v889 = vmul.f32 %v761, %v761
      %v890 = vmul.f32 %v762, %v762
      %v891 = vmul.f32 %v763, %v763
      %v892 = vmul.f32 %v764, %v764
      %v893 = vmul.f32 %v765, %v765
      %v894 = vmul.f32 %v766, %v766
      %v895 = vmul.f32 %v767, %v767
      %v896 = vmul.f32 %v768, %v768
      %v897 = vmul.f32 %v769, %v769
      %v898 = vmul.f32 %v770, %v770
      %v899 = vmul.f32 %v771, %v771
      %v900 = vmul.f32 %v772, %v772
      %v901 = vmul.f32 %v773, %v773
      %v902 = vmul.f32 %v774, %v774
      %v903 = vmul.f32 %v775, %v775
      %v904 = vmul.f32 %v776, %v776
      %v905 = vmul.f32 %v777, %v777
      %v906 = vadd.f32 %v778, %v842
      %v907 = vadd.f32 %v779, %v843
      %v908 = vadd.f32 %v780, %v844
      %v909 = vadd.f32 %v781, %v845
      %v910 = vadd.f32 %v782, %v846
      %v911 = vadd.f32 %v783, %v847
      %v912 = vadd.f32 %v784, %v848
      %v913 = vadd.f32 %v785, %v849
      %v914 = vadd.f32 %v786, %v850
      %v915 = vadd.f32 %v787, %v851
      %v916 = vadd.f32 %v788, %v852
      %v917 = vadd.f32 %v789, %v853
      %v918 = vadd.f32 %v790, %v854
      %v919 = vadd.f32 %v791, %v855
      %v920 = vadd.f32 %v792, %v856
      %v921 = vadd.f32 %v793, %v857
      %v922 = vadd.f32 %v794, %v858
      %v923 = vadd.f32 %v795, %v859
      %v924 = vadd.f32 %v796, %v860
      %v925 = vadd.f32 %v797, %v861
      %v926 = vadd.f32 %v798, %v862
      %v927 = vadd.f32 %v799, %v863
      %v928 = vadd.f32 %v800, %v864
      %v929 = vadd.f32 %v801, %v865
      %v930 = vadd.f32 %v802, %v866
      %v931 = vadd.f32 %v803, %v867
      %v932 = vadd.f32 %v804, %v868
      %v933 = vadd.f32 %v805, %v869
      %v934 = vadd.f32 %v806, %v870
      %v935 = vadd.f32 %v807, %v871
      %v936 = vadd.f32 %v808, %v872
      %v937 = vadd.f32 %v809, %v873
      %v938 = vadd.f32 %v810, %v874
      %v939 = vadd.f32 %v811, %v875
      %v940 = vadd.f32 %v812, %v876
      %v941 = vadd.f32 %v813, %v877
      %v942 = vadd.f32 %v814, %v878
      %v943 = vadd.f32 %v815, %v879
      %v944 = vadd.f32 %v816, %v880
      %v945 = vadd.f32 %v817, %v881
      %v946 = vadd.f32 %v818, %v882
      %v947 = vadd.f32 %v819, %v883
      %v948 = vadd.f32 %v820, %v884
      %v949 = vadd.f32 %v821, %v885
      %v950 = vadd.f32 %v822, %v886
      %v951 = vadd.f32 %v823, %v887
      %v952 = vadd.f32 %v824, %v888
      %v953 = vadd.f32 %v825, %v889
      %v954 = vadd.f32 %v826, %v890
      %v955 = vadd.f32 %v827, %v891
      %v956 = vadd.f32 %v828, %v892
      %v957 = vadd.f32 %v829, %v893
      %v958 = vadd.f32 %v830, %v894
      %v959 = vadd.f32 %v831, %v895
      %v960 = vadd.f32 %v832, %v896
      %v961 = vadd.f32 %v833, %v897
      %v962 = vadd.f32 %v834, %v898
      %v963 = vadd.f32 %v835, %v899
      %v964 = vadd.f32 %v836, %v900
      %v965 = vadd.f32 %v837, %v901
      %v966 = vadd.f32 %v838, %v902
      %v967 = vadd.f32 %v839, %v903
      %v968 = vadd.f32 %v840, %v904
      %v969 = vadd.f32 %v841, %v905
      %970 = vset.pattern.permute.xlu0 2
      %971 = vperm.xlu0 %970, %v308
      %v972 = vpop.permute.xlu0 %971
      %974 = vset.pattern.permute.xlu0 2
      %975 = vperm.xlu0 %974, %v309
      %v976 = vpop.permute.xlu0 %975
      %978 = vset.pattern.permute.xlu0 2
      %979 = vperm.xlu0 %978, %v310
      %v980 = vpop.permute.xlu0 %979
      %982 = vset.pattern.permute.xlu0 2
      %983 = vperm.xlu0 %982, %v311
      %v984 = vpop.permute.xlu0 %983
      %986 = vset.pattern.permute.xlu0 2
      %987 = vperm.xlu0 %986, %v312
      %v988 = vpop.permute.xlu0 %987
      %990 = vset.pattern.permute.xlu0 2
      %991 = vperm.xlu0 %990, %v313
      %v992 = vpop.permute.xlu0 %991
      %994 = vset.pattern.permute.xlu0 2
      %995 = vperm.xlu0 %994, %v314
      %v996 = vpop.permute.xlu0 %995
      %998 = vset.pattern.permute.xlu0 2
      %999 = vperm.xlu0 %998, %v315
      %v1000 = vpop.permute.xlu0 %999
      %1002 = vset.pattern.permute.xlu0 2
      %1003 = vperm.xlu0 %1002, %v316
      %v1004 = vpop.permute.xlu0 %1003
      %1006 = vset.pattern.permute.xlu0 2
      %1007 = vperm.xlu0 %1006, %v317
      %v1008 = vpop.permute.xlu0 %1007
      %1010 = vset.pattern.permute.xlu0 2
      %1011 = vperm.xlu0 %1010, %v318
      %v1012 = vpop.permute.xlu0 %1011
      %1014 = vset.pattern.permute.xlu0 2
      %1015 = vperm.xlu0 %1014, %v319
      %v1016 = vpop.permute.xlu0 %1015
      %1018 = vset.pattern.permute.xlu0 2
      %1019 = vperm.xlu0 %1018, %v320
      %v1020 = vpop.permute.xlu0 %1019
      %1022 = vset.pattern.permute.xlu0 2
      %1023 = vperm.xlu0 %1022, %v321
      %v1024 = vpop.permute.xlu0 %1023
      %1026 = vset.pattern.permute.xlu0 2
      %1027 = vperm.xlu0 %1026, %v322
      %v1028 = vpop.permute.xlu0 %1027
      %1030 = vset.pattern.permute.xlu0 2
      %1031 = vperm.xlu0 %1030, %v323
      %v1032 = vpop.permute.xlu0 %1031
      %1034 = vset.pattern.permute.xlu0 2
      %1035 = vperm.xlu0 %1034, %v324
      %v1036 = vpop.permute.xlu0 %1035
      %1038 = vset.pattern.permute.xlu0 2
      %1039 = vperm.xlu0 %1038, %v325
      %v1040 = vpop.permute.xlu0 %1039
      %1042 = vset.pattern.permute.xlu0 2
      %1043 = vperm.xlu0 %1042, %v326
      %v1044 = vpop.permute.xlu0 %1043
      %1046 = vset.pattern.permute.xlu0 2
      %1047 = vperm.xlu0 %1046, %v327
      %v1048 = vpop.permute.xlu0 %1047
      %1050 = vset.pattern.permute.xlu0 2
      %1051 = vperm.xlu0 %1050, %v328
      %v1052 = vpop.permute.xlu0 %1051
      %1054 = vset.pattern.permute.xlu0 2
      %1055 = vperm.xlu0 %1054, %v329
      %v1056 = vpop.permute.xlu0 %1055
      %1058 = vset.pattern.permute.xlu0 2
      %1059 = vperm.xlu0 %1058, %v330
      %v1060 = vpop.permute.xlu0 %1059
      %1062 = vset.pattern.permute.xlu0 2
      %1063 = vperm.xlu0 %1062, %v331
      %v1064 = vpop.permute.xlu0 %1063
      %1066 = vset.pattern.permute.xlu0 2
      %1067 = vperm.xlu0 %1066, %v332
      %v1068 = vpop.permute.xlu0 %1067
      %1070 = vset.pattern.permute.xlu0 2
      %1071 = vperm.xlu0 %1070, %v333
      %v1072 = vpop.permute.xlu0 %1071
      %1074 = vset.pattern.permute.xlu0 2
      %1075 = vperm.xlu0 %1074, %v334
      %v1076 = vpop.permute.xlu0 %1075
      %1078 = vset.pattern.permute.xlu0 2
      %1079 = vperm.xlu0 %1078, %v335
      %v1080 = vpop.permute.xlu0 %1079
      %1082 = vset.pattern.permute.xlu0 2
      %1083 = vperm.xlu0 %1082, %v336
      %v1084 = vpop.permute.xlu0 %1083
      %1086 = vset.pattern.permute.xlu0 2
      %1087 = vperm.xlu0 %1086, %v337
      %v1088 = vpop.permute.xlu0 %1087
      %1090 = vset.pattern.permute.xlu0 2
      %1091 = vperm.xlu0 %1090, %v338
      %v1092 = vpop.permute.xlu0 %1091
      %1094 = vset.pattern.permute.xlu0 2
      %1095 = vperm.xlu0 %1094, %v339
      %v1096 = vpop.permute.xlu0 %1095
      %v1098 = vsub.f32 %v972, %v906
      %v1099 = vsub.f32 %v972, %v907
      %v1100 = vsub.f32 %v976, %v908
      %v1101 = vsub.f32 %v976, %v909
      %v1102 = vsub.f32 %v980, %v910
      %v1103 = vsub.f32 %v980, %v911
      %v1104 = vsub.f32 %v984, %v912
      %v1105 = vsub.f32 %v984, %v913
      %v1106 = vsub.f32 %v988, %v914
      %v1107 = vsub.f32 %v988, %v915
      %v1108 = vsub.f32 %v992, %v916
      %v1109 = vsub.f32 %v992, %v917
      %v1110 = vsub.f32 %v996, %v918
      %v1111 = vsub.f32 %v996, %v919
      %v1112 = vsub.f32 %v1000, %v920
      %v1113 = vsub.f32 %v1000, %v921
      %v1114 = vsub.f32 %v1004, %v922
      %v1115 = vsub.f32 %v1004, %v923
      %v1116 = vsub.f32 %v1008, %v924
      %v1117 = vsub.f32 %v1008, %v925
      %v1118 = vsub.f32 %v1012, %v926
      %v1119 = vsub.f32 %v1012, %v927
      %v1120 = vsub.f32 %v1016, %v928
      %v1121 = vsub.f32 %v1016, %v929
      %v1122 = vsub.f32 %v1020, %v930
      %v1123 = vsub.f32 %v1020, %v931
      %v1124 = vsub.f32 %v1024, %v932
      %v1125 = vsub.f32 %v1024, %v933
      %v1126 = vsub.f32 %v1028, %v934
      %v1127 = vsub.f32 %v1028, %v935
      %v1128 = vsub.f32 %v1032, %v936
      %v1129 = vsub.f32 %v1032, %v937
      %v1130 = vsub.f32 %v1036, %v938
      %v1131 = vsub.f32 %v1036, %v939
      %v1132 = vsub.f32 %v1040, %v940
      %v1133 = vsub.f32 %v1040, %v941
      %v1134 = vsub.f32 %v1044, %v942
      %v1135 = vsub.f32 %v1044, %v943
      %v1136 = vsub.f32 %v1048, %v944
      %v1137 = vsub.f32 %v1048, %v945
      %v1138 = vsub.f32 %v1052, %v946
      %v1139 = vsub.f32 %v1052, %v947
      %v1140 = vsub.f32 %v1056, %v948
      %v1141 = vsub.f32 %v1056, %v949
      %v1142 = vsub.f32 %v1060, %v950
      %v1143 = vsub.f32 %v1060, %v951
      %v1144 = vsub.f32 %v1064, %v952
      %v1145 = vsub.f32 %v1064, %v953
      %v1146 = vsub.f32 %v1068, %v954
      %v1147 = vsub.f32 %v1068, %v955
      %v1148 = vsub.f32 %v1072, %v956
      %v1149 = vsub.f32 %v1072, %v957
      %v1150 = vsub.f32 %v1076, %v958
      %v1151 = vsub.f32 %v1076, %v959
      %v1152 = vsub.f32 %v1080, %v960
      %v1153 = vsub.f32 %v1080, %v961
      %v1154 = vsub.f32 %v1084, %v962
      %v1155 = vsub.f32 %v1084, %v963
      %v1156 = vsub.f32 %v1088, %v964
      %v1157 = vsub.f32 %v1088, %v965
      %v1158 = vsub.f32 %v1092, %v966
      %v1159 = vsub.f32 %v1092, %v967
      %v1160 = vsub.f32 %v1096, %v968
      %v1161 = vsub.f32 %v1096, %v969
      %1162 = vset.pattern.permute.xlu0 3
      %1163 = vperm.xlu0 %1162, %v308
      %v1164 = vpop.permute.xlu0 %1163
      %1166 = vset.pattern.permute.xlu0 3
      %1167 = vperm.xlu0 %1166, %v309
      %v1168 = vpop.permute.xlu0 %1167
      %1170 = vset.pattern.permute.xlu0 3
      %1171 = vperm.xlu0 %1170, %v310
      %v1172 = vpop.permute.xlu0 %1171
      %1174 = vset.pattern.permute.xlu0 3
      %1175 = vperm.xlu0 %1174, %v311
      %v1176 = vpop.permute.xlu0 %1175
      %1178 = vset.pattern.permute.xlu0 3
      %1179 = vperm.xlu0 %1178, %v312
      %v1180 = vpop.permute.xlu0 %1179
      %1182 = vset.pattern.permute.xlu0 3
      %1183 = vperm.xlu0 %1182, %v313
      %v1184 = vpop.permute.xlu0 %1183
      %1186 = vset.pattern.permute.xlu0 3
      %1187 = vperm.xlu0 %1186, %v314
      %v1188 = vpop.permute.xlu0 %1187
      %1190 = vset.pattern.permute.xlu0 3
      %1191 = vperm.xlu0 %1190, %v315
      %v1192 = vpop.permute.xlu0 %1191
      %1194 = vset.pattern.permute.xlu0 3
      %1195 = vperm.xlu0 %1194, %v316
      %v1196 = vpop.permute.xlu0 %1195
      %1198 = vset.pattern.permute.xlu0 3
      %1199 = vperm.xlu0 %1198, %v317
      %v1200 = vpop.permute.xlu0 %1199
      %1202 = vset.pattern.permute.xlu0 3
      %1203 = vperm.xlu0 %1202, %v318
      %v1204 = vpop.permute.xlu0 %1203
      %1206 = vset.pattern.permute.xlu0 3
      %1207 = vperm.xlu0 %1206, %v319
      %v1208 = vpop.permute.xlu0 %1207
      %1210 = vset.pattern.permute.xlu0 3
      %1211 = vperm.xlu0 %1210, %v320
      %v1212 = vpop.permute.xlu0 %1211
      %1214 = vset.pattern.permute.xlu0 3
      %1215 = vperm.xlu0 %1214, %v321
      %v1216 = vpop.permute.xlu0 %1215
      %1218 = vset.pattern.permute.xlu0 3
      %1219 = vperm.xlu0 %1218, %v322
      %v1220 = vpop.permute.xlu0 %1219
      %1222 = vset.pattern.permute.xlu0 3
      %1223 = vperm.xlu0 %1222, %v323
      %v1224 = vpop.permute.xlu0 %1223
      %1226 = vset.pattern.permute.xlu0 3
      %1227 = vperm.xlu0 %1226, %v324
      %v1228 = vpop.permute.xlu0 %1227
      %1230 = vset.pattern.permute.xlu0 3
      %1231 = vperm.xlu0 %1230, %v325
      %v1232 = vpop.permute.xlu0 %1231
      %1234 = vset.pattern.permute.xlu0 3
      %1235 = vperm.xlu0 %1234, %v326
      %v1236 = vpop.permute.xlu0 %1235
      %1238 = vset.pattern.permute.xlu0 3
      %1239 = vperm.xlu0 %1238, %v327
      %v1240 = vpop.permute.xlu0 %1239
      %1242 = vset.pattern.permute.xlu0 3
      %1243 = vperm.xlu0 %1242, %v328
      %v1244 = vpop.permute.xlu0 %1243
      %1246 = vset.pattern.permute.xlu0 3
      %1247 = vperm.xlu0 %1246, %v329
      %v1248 = vpop.permute.xlu0 %1247
      %1250 = vset.pattern.permute.xlu0 3
      %1251 = vperm.xlu0 %1250, %v330
      %v1252 = vpop.permute.xlu0 %1251
      %1254 = vset.pattern.permute.xlu0 3
      %1255 = vperm.xlu0 %1254, %v331
      %v1256 = vpop.permute.xlu0 %1255
      %1258 = vset.pattern.permute.xlu0 3
      %1259 = vperm.xlu0 %1258, %v332
      %v1260 = vpop.permute.xlu0 %1259
      %1262 = vset.pattern.permute.xlu0 3
      %1263 = vperm.xlu0 %1262, %v333
      %v1264 = vpop.permute.xlu0 %1263
      %1266 = vset.pattern.permute.xlu0 3
      %1267 = vperm.xlu0 %1266, %v334
      %v1268 = vpop.permute.xlu0 %1267
      %1270 = vset.pattern.permute.xlu0 3
      %1271 = vperm.xlu0 %1270, %v335
      %v1272 = vpop.permute.xlu0 %1271
      %1274 = vset.pattern.permute.xlu0 3
      %1275 = vperm.xlu0 %1274, %v336
      %v1276 = vpop.permute.xlu0 %1275
      %1278 = vset.pattern.permute.xlu0 3
      %1279 = vperm.xlu0 %1278, %v337
      %v1280 = vpop.permute.xlu0 %1279
      %1282 = vset.pattern.permute.xlu0 3
      %1283 = vperm.xlu0 %1282, %v338
      %v1284 = vpop.permute.xlu0 %1283
      %1286 = vset.pattern.permute.xlu0 3
      %1287 = vperm.xlu0 %1286, %v339
      %v1288 = vpop.permute.xlu0 %1287
      %v1290 = vmul.f32 %v1098, %v1164
      %v1291 = vmul.f32 %v1099, %v1164
      %v1292 = vmul.f32 %v1100, %v1168
      %v1293 = vmul.f32 %v1101, %v1168
      %v1294 = vmul.f32 %v1102, %v1172
      %v1295 = vmul.f32 %v1103, %v1172
      %v1296 = vmul.f32 %v1104, %v1176
      %v1297 = vmul.f32 %v1105, %v1176
      %v1298 = vmul.f32 %v1106, %v1180
      %v1299 = vmul.f32 %v1107, %v1180
      %v1300 = vmul.f32 %v1108, %v1184
      %v1301 = vmul.f32 %v1109, %v1184
      %v1302 = vmul.f32 %v1110, %v1188
      %v1303 = vmul.f32 %v1111, %v1188
      %v1304 = vmul.f32 %v1112, %v1192
      %v1305 = vmul.f32 %v1113, %v1192
      %v1306 = vmul.f32 %v1114, %v1196
      %v1307 = vmul.f32 %v1115, %v1196
      %v1308 = vmul.f32 %v1116, %v1200
      %v1309 = vmul.f32 %v1117, %v1200
      %v1310 = vmul.f32 %v1118, %v1204
      %v1311 = vmul.f32 %v1119, %v1204
      %v1312 = vmul.f32 %v1120, %v1208
      %v1313 = vmul.f32 %v1121, %v1208
      %v1314 = vmul.f32 %v1122, %v1212
      %v1315 = vmul.f32 %v1123, %v1212
      %v1316 = vmul.f32 %v1124, %v1216
      %v1317 = vmul.f32 %v1125, %v1216
      %v1318 = vmul.f32 %v1126, %v1220
      %v1319 = vmul.f32 %v1127, %v1220
      %v1320 = vmul.f32 %v1128, %v1224
      %v1321 = vmul.f32 %v1129, %v1224
      %v1322 = vmul.f32 %v1130, %v1228
      %v1323 = vmul.f32 %v1131, %v1228
      %v1324 = vmul.f32 %v1132, %v1232
      %v1325 = vmul.f32 %v1133, %v1232
      %v1326 = vmul.f32 %v1134, %v1236
      %v1327 = vmul.f32 %v1135, %v1236
      %v1328 = vmul.f32 %v1136, %v1240
      %v1329 = vmul.f32 %v1137, %v1240
      %v1330 = vmul.f32 %v1138, %v1244
      %v1331 = vmul.f32 %v1139, %v1244
      %v1332 = vmul.f32 %v1140, %v1248
      %v1333 = vmul.f32 %v1141, %v1248
      %v1334 = vmul.f32 %v1142, %v1252
      %v1335 = vmul.f32 %v1143, %v1252
      %v1336 = vmul.f32 %v1144, %v1256
      %v1337 = vmul.f32 %v1145, %v1256
      %v1338 = vmul.f32 %v1146, %v1260
      %v1339 = vmul.f32 %v1147, %v1260
      %v1340 = vmul.f32 %v1148, %v1264
      %v1341 = vmul.f32 %v1149, %v1264
      %v1342 = vmul.f32 %v1150, %v1268
      %v1343 = vmul.f32 %v1151, %v1268
      %v1344 = vmul.f32 %v1152, %v1272
      %v1345 = vmul.f32 %v1153, %v1272
      %v1346 = vmul.f32 %v1154, %v1276
      %v1347 = vmul.f32 %v1155, %v1276
      %v1348 = vmul.f32 %v1156, %v1280
      %v1349 = vmul.f32 %v1157, %v1280
      %v1350 = vmul.f32 %v1158, %v1284
      %v1351 = vmul.f32 %v1159, %v1284
      %v1352 = vmul.f32 %v1160, %v1288
      %v1353 = vmul.f32 %v1161, %v1288
      %v1354 = vmax.f32 %v1290, 0.0
      %v1355 = vmax.f32 %v1291, 0.0
      %v1356 = vmax.f32 %v1292, 0.0
      %v1357 = vmax.f32 %v1293, 0.0
      %v1358 = vmax.f32 %v1294, 0.0
      %v1359 = vmax.f32 %v1295, 0.0
      %v1360 = vmax.f32 %v1296, 0.0
      %v1361 = vmax.f32 %v1297, 0.0
      %v1362 = vmax.f32 %v1298, 0.0
      %v1363 = vmax.f32 %v1299, 0.0
      %v1364 = vmax.f32 %v1300, 0.0
      %v1365 = vmax.f32 %v1301, 0.0
      %v1366 = vmax.f32 %v1302, 0.0
      %v1367 = vmax.f32 %v1303, 0.0
      %v1368 = vmax.f32 %v1304, 0.0
      %v1369 = vmax.f32 %v1305, 0.0
      %v1370 = vmax.f32 %v1306, 0.0
      %v1371 = vmax.f32 %v1307, 0.0
      %v1372 = vmax.f32 %v1308, 0.0
      %v1373 = vmax.f32 %v1309, 0.0
      %v1374 = vmax.f32 %v1310, 0.0
      %v1375 = vmax.f32 %v1311, 0.0
      %v1376 = vmax.f32 %v1312, 0.0
      %v1377 = vmax.f32 %v1313, 0.0
      %v1378 = vmax.f32 %v1314, 0.0
      %v1379 = vmax.f32 %v1315, 0.0
      %v1380 = vmax.f32 %v1316, 0.0
      %v1381 = vmax.f32 %v1317, 0.0
      %v1382 = vmax.f32 %v1318, 0.0
      %v1383 = vmax.f32 %v1319, 0.0
      %v1384 = vmax.f32 %v1320, 0.0
      %v1385 = vmax.f32 %v1321, 0.0
      %v1386 = vmax.f32 %v1322, 0.0
      %v1387 = vmax.f32 %v1323, 0.0
      %v1388 = vmax.f32 %v1324, 0.0
      %v1389 = vmax.f32 %v1325, 0.0
      %v1390 = vmax.f32 %v1326, 0.0
      %v1391 = vmax.f32 %v1327, 0.0
      %v1392 = vmax.f32 %v1328, 0.0
      %v1393 = vmax.f32 %v1329, 0.0
      %v1394 = vmax.f32 %v1330, 0.0
      %v1395 = vmax.f32 %v1331, 0.0
      %v1396 = vmax.f32 %v1332, 0.0
      %v1397 = vmax.f32 %v1333, 0.0
      %v1398 = vmax.f32 %v1334, 0.0
      %v1399 = vmax.f32 %v1335, 0.0
      %v1400 = vmax.f32 %v1336, 0.0
      %v1401 = vmax.f32 %v1337, 0.0
      %v1402 = vmax.f32 %v1338, 0.0
      %v1403 = vmax.f32 %v1339, 0.0
      %v1404 = vmax.f32 %v1340, 0.0
      %v1405 = vmax.f32 %v1341, 0.0
      %v1406 = vmax.f32 %v1342, 0.0
      %v1407 = vmax.f32 %v1343, 0.0
      %v1408 = vmax.f32 %v1344, 0.0
      %v1409 = vmax.f32 %v1345, 0.0
      %v1410 = vmax.f32 %v1346, 0.0
      %v1411 = vmax.f32 %v1347, 0.0
      %v1412 = vmax.f32 %v1348, 0.0
      %v1413 = vmax.f32 %v1349, 0.0
      %v1414 = vmax.f32 %v1350, 0.0
      %v1415 = vmax.f32 %v1351, 0.0
      %v1416 = vmax.f32 %v1352, 0.0
      %v1417 = vmax.f32 %v1353, 0.0
      %v1418 = vmin.f32 %v1354, 1.0
      %v1419 = vmin.f32 %v1355, 1.0
      %v1420 = vmin.f32 %v1356, 1.0
      %v1421 = vmin.f32 %v1357, 1.0
      %v1422 = vmin.f32 %v1358, 1.0
      %v1423 = vmin.f32 %v1359, 1.0
      %v1424 = vmin.f32 %v1360, 1.0
      %v1425 = vmin.f32 %v1361, 1.0
      %v1426 = vmin.f32 %v1362, 1.0
      %v1427 = vmin.f32 %v1363, 1.0
      %v1428 = vmin.f32 %v1364, 1.0
      %v1429 = vmin.f32 %v1365, 1.0
      %v1430 = vmin.f32 %v1366, 1.0
      %v1431 = vmin.f32 %v1367, 1.0
      %v1432 = vmin.f32 %v1368, 1.0
      %v1433 = vmin.f32 %v1369, 1.0
      %v1434 = vmin.f32 %v1370, 1.0
      %v1435 = vmin.f32 %v1371, 1.0
      %v1436 = vmin.f32 %v1372, 1.0
      %v1437 = vmin.f32 %v1373, 1.0
      %v1438 = vmin.f32 %v1374, 1.0
      %v1439 = vmin.f32 %v1375, 1.0
      %v1440 = vmin.f32 %v1376, 1.0
      %v1441 = vmin.f32 %v1377, 1.0
      %v1442 = vmin.f32 %v1378, 1.0
      %v1443 = vmin.f32 %v1379, 1.0
      %v1444 = vmin.f32 %v1380, 1.0
      %v1445 = vmin.f32 %v1381, 1.0
      %v1446 = vmin.f32 %v1382, 1.0
      %v1447 = vmin.f32 %v1383, 1.0
      %v1448 = vmin.f32 %v1384, 1.0
      %v1449 = vmin.f32 %v1385, 1.0
      %v1450 = vmin.f32 %v1386, 1.0
      %v1451 = vmin.f32 %v1387, 1.0
      %v1452 = vmin.f32 %v1388, 1.0
      %v1453 = vmin.f32 %v1389, 1.0
      %v1454 = vmin.f32 %v1390, 1.0
      %v1455 = vmin.f32 %v1391, 1.0
      %v1456 = vmin.f32 %v1392, 1.0
      %v1457 = vmin.f32 %v1393, 1.0
      %v1458 = vmin.f32 %v1394, 1.0
      %v1459 = vmin.f32 %v1395, 1.0
      %v1460 = vmin.f32 %v1396, 1.0
      %v1461 = vmin.f32 %v1397, 1.0
      %v1462 = vmin.f32 %v1398, 1.0
      %v1463 = vmin.f32 %v1399, 1.0
      %v1464 = vmin.f32 %v1400, 1.0
      %v1465 = vmin.f32 %v1401, 1.0
      %v1466 = vmin.f32 %v1402, 1.0
      %v1467 = vmin.f32 %v1403, 1.0
      %v1468 = vmin.f32 %v1404, 1.0
      %v1469 = vmin.f32 %v1405, 1.0
      %v1470 = vmin.f32 %v1406, 1.0
      %v1471 = vmin.f32 %v1407, 1.0
      %v1472 = vmin.f32 %v1408, 1.0
      %v1473 = vmin.f32 %v1409, 1.0
      %v1474 = vmin.f32 %v1410, 1.0
      %v1475 = vmin.f32 %v1411, 1.0
      %v1476 = vmin.f32 %v1412, 1.0
      %v1477 = vmin.f32 %v1413, 1.0
      %v1478 = vmin.f32 %v1414, 1.0
      %v1479 = vmin.f32 %v1415, 1.0
      %v1480 = vmin.f32 %v1416, 1.0
      %v1481 = vmin.f32 %v1417, 1.0
      %vm1482 = vcmp.gt.f32.partialorder %v1098, 0.0
      %vm1483 = vcmp.gt.f32.partialorder %v1099, 0.0
      %vm1484 = vcmp.gt.f32.partialorder %v1100, 0.0
      %vm1485 = vcmp.gt.f32.partialorder %v1101, 0.0
      %vm1486 = vcmp.gt.f32.partialorder %v1102, 0.0
      %vm1487 = vcmp.gt.f32.partialorder %v1103, 0.0
      %vm1488 = vcmp.gt.f32.partialorder %v1104, 0.0
      %vm1489 = vcmp.gt.f32.partialorder %v1105, 0.0
      %vm1490 = vcmp.gt.f32.partialorder %v1106, 0.0
      %vm1491 = vcmp.gt.f32.partialorder %v1107, 0.0
      %vm1492 = vcmp.gt.f32.partialorder %v1108, 0.0
      %vm1493 = vcmp.gt.f32.partialorder %v1109, 0.0
      %vm1494 = vcmp.gt.f32.partialorder %v1110, 0.0
      %vm1495 = vcmp.gt.f32.partialorder %v1111, 0.0
      %vm1496 = vcmp.gt.f32.partialorder %v1112, 0.0
      %vm1497 = vcmp.gt.f32.partialorder %v1113, 0.0
      %vm1498 = vcmp.gt.f32.partialorder %v1114, 0.0
      %vm1499 = vcmp.gt.f32.partialorder %v1115, 0.0
      %vm1500 = vcmp.gt.f32.partialorder %v1116, 0.0
      %vm1501 = vcmp.gt.f32.partialorder %v1117, 0.0
      %vm1502 = vcmp.gt.f32.partialorder %v1118, 0.0
      %vm1503 = vcmp.gt.f32.partialorder %v1119, 0.0
      %vm1504 = vcmp.gt.f32.partialorder %v1120, 0.0
      %vm1505 = vcmp.gt.f32.partialorder %v1121, 0.0
      %vm1506 = vcmp.gt.f32.partialorder %v1122, 0.0
      %vm1507 = vcmp.gt.f32.partialorder %v1123, 0.0
      %vm1508 = vcmp.gt.f32.partialorder %v1124, 0.0
      %vm1509 = vcmp.gt.f32.partialorder %v1125, 0.0
      %vm1510 = vcmp.gt.f32.partialorder %v1126, 0.0
      %vm1511 = vcmp.gt.f32.partialorder %v1127, 0.0
      %vm1512 = vcmp.gt.f32.partialorder %v1128, 0.0
      %vm1513 = vcmp.gt.f32.partialorder %v1129, 0.0
      %vm1514 = vcmp.gt.f32.partialorder %v1130, 0.0
      %vm1515 = vcmp.gt.f32.partialorder %v1131, 0.0
      %vm1516 = vcmp.gt.f32.partialorder %v1132, 0.0
      %vm1517 = vcmp.gt.f32.partialorder %v1133, 0.0
      %vm1518 = vcmp.gt.f32.partialorder %v1134, 0.0
      %vm1519 = vcmp.gt.f32.partialorder %v1135, 0.0
      %vm1520 = vcmp.gt.f32.partialorder %v1136, 0.0
      %vm1521 = vcmp.gt.f32.partialorder %v1137, 0.0
      %vm1522 = vcmp.gt.f32.partialorder %v1138, 0.0
      %vm1523 = vcmp.gt.f32.partialorder %v1139, 0.0
      %vm1524 = vcmp.gt.f32.partialorder %v1140, 0.0
      %vm1525 = vcmp.gt.f32.partialorder %v1141, 0.0
      %vm1526 = vcmp.gt.f32.partialorder %v1142, 0.0
      %vm1527 = vcmp.gt.f32.partialorder %v1143, 0.0
      %vm1528 = vcmp.gt.f32.partialorder %v1144, 0.0
      %vm1529 = vcmp.gt.f32.partialorder %v1145, 0.0
      %vm1530 = vcmp.gt.f32.partialorder %v1146, 0.0
      %vm1531 = vcmp.gt.f32.partialorder %v1147, 0.0
      %vm1532 = vcmp.gt.f32.partialorder %v1148, 0.0
      %vm1533 = vcmp.gt.f32.partialorder %v1149, 0.0
      %vm1534 = vcmp.gt.f32.partialorder %v1150, 0.0
      %vm1535 = vcmp.gt.f32.partialorder %v1151, 0.0
      %vm1536 = vcmp.gt.f32.partialorder %v1152, 0.0
      %vm1537 = vcmp.gt.f32.partialorder %v1153, 0.0
      %vm1538 = vcmp.gt.f32.partialorder %v1154, 0.0
      %vm1539 = vcmp.gt.f32.partialorder %v1155, 0.0
      %vm1540 = vcmp.gt.f32.partialorder %v1156, 0.0
      %vm1541 = vcmp.gt.f32.partialorder %v1157, 0.0
      %vm1542 = vcmp.gt.f32.partialorder %v1158, 0.0
      %vm1543 = vcmp.gt.f32.partialorder %v1159, 0.0
      %vm1544 = vcmp.gt.f32.partialorder %v1160, 0.0
      %vm1545 = vcmp.gt.f32.partialorder %v1161, 0.0
      %1546 = vset.pattern.permute.xlu0 4
      %1547 = vperm.xlu0 %1546, %v308
      %v1548 = vpop.permute.xlu0 %1547
      %1550 = vset.pattern.permute.xlu0 4
      %1551 = vperm.xlu0 %1550, %v309
      %v1552 = vpop.permute.xlu0 %1551
      %1554 = vset.pattern.permute.xlu0 4
      %1555 = vperm.xlu0 %1554, %v310
      %v1556 = vpop.permute.xlu0 %1555
      %1558 = vset.pattern.permute.xlu0 4
      %1559 = vperm.xlu0 %1558, %v311
      %v1560 = vpop.permute.xlu0 %1559
      %1562 = vset.pattern.permute.xlu0 4
      %1563 = vperm.xlu0 %1562, %v312
      %v1564 = vpop.permute.xlu0 %1563
      %1566 = vset.pattern.permute.xlu0 4
      %1567 = vperm.xlu0 %1566, %v313
      %v1568 = vpop.permute.xlu0 %1567
      %1570 = vset.pattern.permute.xlu0 4
      %1571 = vperm.xlu0 %1570, %v314
      %v1572 = vpop.permute.xlu0 %1571
      %1574 = vset.pattern.permute.xlu0 4
      %1575 = vperm.xlu0 %1574, %v315
      %v1576 = vpop.permute.xlu0 %1575
      %1578 = vset.pattern.permute.xlu0 4
      %1579 = vperm.xlu0 %1578, %v316
      %v1580 = vpop.permute.xlu0 %1579
      %1582 = vset.pattern.permute.xlu0 4
      %1583 = vperm.xlu0 %1582, %v317
      %v1584 = vpop.permute.xlu0 %1583
      %1586 = vset.pattern.permute.xlu0 4
      %1587 = vperm.xlu0 %1586, %v318
      %v1588 = vpop.permute.xlu0 %1587
      %1590 = vset.pattern.permute.xlu0 4
      %1591 = vperm.xlu0 %1590, %v319
      %v1592 = vpop.permute.xlu0 %1591
      %1594 = vset.pattern.permute.xlu0 4
      %1595 = vperm.xlu0 %1594, %v320
      %v1596 = vpop.permute.xlu0 %1595
      %1598 = vset.pattern.permute.xlu0 4
      %1599 = vperm.xlu0 %1598, %v321
      %v1600 = vpop.permute.xlu0 %1599
      %1602 = vset.pattern.permute.xlu0 4
      %1603 = vperm.xlu0 %1602, %v322
      %v1604 = vpop.permute.xlu0 %1603
      %1606 = vset.pattern.permute.xlu0 4
      %1607 = vperm.xlu0 %1606, %v323
      %v1608 = vpop.permute.xlu0 %1607
      %1610 = vset.pattern.permute.xlu0 4
      %1611 = vperm.xlu0 %1610, %v324
      %v1612 = vpop.permute.xlu0 %1611
      %1614 = vset.pattern.permute.xlu0 4
      %1615 = vperm.xlu0 %1614, %v325
      %v1616 = vpop.permute.xlu0 %1615
      %1618 = vset.pattern.permute.xlu0 4
      %1619 = vperm.xlu0 %1618, %v326
      %v1620 = vpop.permute.xlu0 %1619
      %1622 = vset.pattern.permute.xlu0 4
      %1623 = vperm.xlu0 %1622, %v327
      %v1624 = vpop.permute.xlu0 %1623
      %1626 = vset.pattern.permute.xlu0 4
      %1627 = vperm.xlu0 %1626, %v328
      %v1628 = vpop.permute.xlu0 %1627
      %1630 = vset.pattern.permute.xlu0 4
      %1631 = vperm.xlu0 %1630, %v329
      %v1632 = vpop.permute.xlu0 %1631
      %1634 = vset.pattern.permute.xlu0 4
      %1635 = vperm.xlu0 %1634, %v330
      %v1636 = vpop.permute.xlu0 %1635
      %1638 = vset.pattern.permute.xlu0 4
      %1639 = vperm.xlu0 %1638, %v331
      %v1640 = vpop.permute.xlu0 %1639
      %1642 = vset.pattern.permute.xlu0 4
      %1643 = vperm.xlu0 %1642, %v332
      %v1644 = vpop.permute.xlu0 %1643
      %1646 = vset.pattern.permute.xlu0 4
      %1647 = vperm.xlu0 %1646, %v333
      %v1648 = vpop.permute.xlu0 %1647
      %1650 = vset.pattern.permute.xlu0 4
      %1651 = vperm.xlu0 %1650, %v334
      %v1652 = vpop.permute.xlu0 %1651
      %1654 = vset.pattern.permute.xlu0 4
      %1655 = vperm.xlu0 %1654, %v335
      %v1656 = vpop.permute.xlu0 %1655
      %1658 = vset.pattern.permute.xlu0 4
      %1659 = vperm.xlu0 %1658, %v336
      %v1660 = vpop.permute.xlu0 %1659
      %1662 = vset.pattern.permute.xlu0 4
      %1663 = vperm.xlu0 %1662, %v337
      %v1664 = vpop.permute.xlu0 %1663
      %1666 = vset.pattern.permute.xlu0 4
      %1667 = vperm.xlu0 %1666, %v338
      %v1668 = vpop.permute.xlu0 %1667
      %1670 = vset.pattern.permute.xlu0 4
      %1671 = vperm.xlu0 %1670, %v339
      %v1672 = vpop.permute.xlu0 %1671
      %v1674 = vsel %vm1482, %v1548, -1e+30
      %v1675 = vsel %vm1483, %v1548, -1e+30
      %v1676 = vsel %vm1484, %v1552, -1e+30
      %v1677 = vsel %vm1485, %v1552, -1e+30
      %v1678 = vsel %vm1486, %v1556, -1e+30
      %v1679 = vsel %vm1487, %v1556, -1e+30
      %v1680 = vsel %vm1488, %v1560, -1e+30
      %v1681 = vsel %vm1489, %v1560, -1e+30
      %v1682 = vsel %vm1490, %v1564, -1e+30
      %v1683 = vsel %vm1491, %v1564, -1e+30
      %v1684 = vsel %vm1492, %v1568, -1e+30
      %v1685 = vsel %vm1493, %v1568, -1e+30
      %v1686 = vsel %vm1494, %v1572, -1e+30
      %v1687 = vsel %vm1495, %v1572, -1e+30
      %v1688 = vsel %vm1496, %v1576, -1e+30
      %v1689 = vsel %vm1497, %v1576, -1e+30
      %v1690 = vsel %vm1498, %v1580, -1e+30
      %v1691 = vsel %vm1499, %v1580, -1e+30
      %v1692 = vsel %vm1500, %v1584, -1e+30
      %v1693 = vsel %vm1501, %v1584, -1e+30
      %v1694 = vsel %vm1502, %v1588, -1e+30
      %v1695 = vsel %vm1503, %v1588, -1e+30
      %v1696 = vsel %vm1504, %v1592, -1e+30
      %v1697 = vsel %vm1505, %v1592, -1e+30
      %v1698 = vsel %vm1506, %v1596, -1e+30
      %v1699 = vsel %vm1507, %v1596, -1e+30
      %v1700 = vsel %vm1508, %v1600, -1e+30
      %v1701 = vsel %vm1509, %v1600, -1e+30
      %v1702 = vsel %vm1510, %v1604, -1e+30
      %v1703 = vsel %vm1511, %v1604, -1e+30
      %v1704 = vsel %vm1512, %v1608, -1e+30
      %v1705 = vsel %vm1513, %v1608, -1e+30
      %v1706 = vsel %vm1514, %v1612, -1e+30
      %v1707 = vsel %vm1515, %v1612, -1e+30
      %v1708 = vsel %vm1516, %v1616, -1e+30
      %v1709 = vsel %vm1517, %v1616, -1e+30
      %v1710 = vsel %vm1518, %v1620, -1e+30
      %v1711 = vsel %vm1519, %v1620, -1e+30
      %v1712 = vsel %vm1520, %v1624, -1e+30
      %v1713 = vsel %vm1521, %v1624, -1e+30
      %v1714 = vsel %vm1522, %v1628, -1e+30
      %v1715 = vsel %vm1523, %v1628, -1e+30
      %v1716 = vsel %vm1524, %v1632, -1e+30
      %v1717 = vsel %vm1525, %v1632, -1e+30
      %v1718 = vsel %vm1526, %v1636, -1e+30
      %v1719 = vsel %vm1527, %v1636, -1e+30
      %v1720 = vsel %vm1528, %v1640, -1e+30
      %v1721 = vsel %vm1529, %v1640, -1e+30
      %v1722 = vsel %vm1530, %v1644, -1e+30
      %v1723 = vsel %vm1531, %v1644, -1e+30
      %v1724 = vsel %vm1532, %v1648, -1e+30
      %v1725 = vsel %vm1533, %v1648, -1e+30
      %v1726 = vsel %vm1534, %v1652, -1e+30
      %v1727 = vsel %vm1535, %v1652, -1e+30
      %v1728 = vsel %vm1536, %v1656, -1e+30
      %v1729 = vsel %vm1537, %v1656, -1e+30
      %v1730 = vsel %vm1538, %v1660, -1e+30
      %v1731 = vsel %vm1539, %v1660, -1e+30
      %v1732 = vsel %vm1540, %v1664, -1e+30
      %v1733 = vsel %vm1541, %v1664, -1e+30
      %v1734 = vsel %vm1542, %v1668, -1e+30
      %v1735 = vsel %vm1543, %v1668, -1e+30
      %v1736 = vsel %vm1544, %v1672, -1e+30
      %v1737 = vsel %vm1545, %v1672, -1e+30
      %v1738 = vld [vmem:[#allocation2] sm:$0x3]
      %v1739 = vmax.f32 %v1674, %v1678
      %v1740 = vmax.f32 %v1676, %v1680
      %v1741 = vmax.f32 %v1739, %v1682
      %v1742 = vmax.f32 %v1740, %v1684
      %v1743 = vmax.f32 %v1741, %v1686
      %v1744 = vmax.f32 %v1742, %v1688
      %v1745 = vmax.f32 %v1743, %v1690
      %v1746 = vmax.f32 %v1744, %v1692
      %v1747 = vmax.f32 %v1745, %v1694
      %v1748 = vmax.f32 %v1746, %v1696
      %v1749 = vmax.f32 %v1747, %v1698
      %v1750 = vmax.f32 %v1748, %v1700
      %v1751 = vmax.f32 %v1749, %v1702
      %v1752 = vmax.f32 %v1750, %v1704
      %v1753 = vmax.f32 %v1751, %v1706
      %v1754 = vmax.f32 %v1752, %v1708
      %v1755 = vmax.f32 %v1753, %v1710
      %v1756 = vmax.f32 %v1754, %v1712
      %v1757 = vmax.f32 %v1755, %v1714
      %v1758 = vmax.f32 %v1756, %v1716
      %v1759 = vmax.f32 %v1757, %v1718
      %v1760 = vmax.f32 %v1758, %v1720
      %v1761 = vmax.f32 %v1759, %v1722
      %v1762 = vmax.f32 %v1760, %v1724
      %v1763 = vmax.f32 %v1761, %v1726
      %v1764 = vmax.f32 %v1762, %v1728
      %v1765 = vmax.f32 %v1763, %v1730
      %v1766 = vmax.f32 %v1764, %v1732
      %v1767 = vmax.f32 %v1765, %v1734
      %v1768 = vmax.f32 %v1766, %v1736
      %v1769 = vmax.f32 %v1767, %v1768
      %v1770 = vrot.slane %v1769, 4
      %v1771 = vmax.f32 %v1769, %v1770
      %v1772 = vrot.slane %v1771, 2
      %v1773 = vmax.f32 %v1771, %v1772
      %v1774 = vrot.slane %v1773, 1
      %v1775 = vmax.f32 %v1773, %v1774
      %v1776 = vmax.f32 %v1675, %v1679
      %v1777 = vmax.f32 %v1677, %v1681
      %v1778 = vmax.f32 %v1776, %v1683
      %v1779 = vmax.f32 %v1777, %v1685
      %v1780 = vmax.f32 %v1778, %v1687
      %v1781 = vmax.f32 %v1779, %v1689
      %v1782 = vmax.f32 %v1780, %v1691
      %v1783 = vmax.f32 %v1781, %v1693
      %v1784 = vmax.f32 %v1782, %v1695
      %v1785 = vmax.f32 %v1783, %v1697
      %v1786 = vmax.f32 %v1784, %v1699
      %v1787 = vmax.f32 %v1785, %v1701
      %v1788 = vmax.f32 %v1786, %v1703
      %v1789 = vmax.f32 %v1787, %v1705
      %v1790 = vmax.f32 %v1788, %v1707
      %v1791 = vmax.f32 %v1789, %v1709
      %v1792 = vmax.f32 %v1790, %v1711
      %v1793 = vmax.f32 %v1791, %v1713
      %v1794 = vmax.f32 %v1792, %v1715
      %v1795 = vmax.f32 %v1793, %v1717
      %v1796 = vmax.f32 %v1794, %v1719
      %v1797 = vmax.f32 %v1795, %v1721
      %v1798 = vmax.f32 %v1796, %v1723
      %v1799 = vmax.f32 %v1797, %v1725
      %v1800 = vmax.f32 %v1798, %v1727
      %v1801 = vmax.f32 %v1799, %v1729
      %v1802 = vmax.f32 %v1800, %v1731
      %v1803 = vmax.f32 %v1801, %v1733
      %v1804 = vmax.f32 %v1802, %v1735
      %v1805 = vmax.f32 %v1803, %v1737
      %v1806 = vmax.f32 %v1804, %v1805
      %v1807 = vrot.slane %v1806, 4
      %v1808 = vmax.f32 %v1806, %v1807
      %v1809 = vrot.slane %v1808, 2
      %v1810 = vmax.f32 %v1808, %v1809
      %v1811 = vrot.slane %v1810, 1
      %v1812 = vmax.f32 %v1810, %v1811
      %v1815 = vcombine.low %v1775, %v1812
      %v1817 = vunpack.c.l.s4 1966171168
      %v1818 = vunpack.c.0.s8 %v1817
      %v1819 = vlaneseq
      %v1820 = vshrl.u32 %v1819, 7
      %v1821 = vsub.s32 %v1818, %v1820
      %v1822 = vrot.slane %v1815, %v1821
      %v1824 = vunpack.c.l.s4 1966171168
      %v1825 = vunpack.c.0.s8 %v1824
      %v1826 = vlaneseq
      %v1827 = vshrl.u32 %v1826, 7
      %v1828 = vsub.s32 %v1825, %v1827
      %v1829 = vrot.slane %v1822, %v1828
      %v1831 = vmax.f32 %v1738, %v1829
      %v1832 = vsub.f32 %v1738, %v1831
      %v1833 = vmul.f32 %v1832, 1.442695
      %v1834 = vpow.pop %v1833
      %v1836 = vlaneseq
      %v1837 = vshrl.u32 %v1836, 7
      %v1838 = vsub.s32 0, %v1837
      %v1839 = vrot.slane %v1831, %v1838
      %v1840 = vlaneseq
      %v1841 = vshrl.u32 %v1840, 7
      %v1842 = vsub.s32 1, %v1841
      %v1843 = vrot.slane %v1831, %v1842
      %v1846 = vsub.f32 %v1674, %v1839
      %v1847 = vsub.f32 %v1675, %v1843
      %v1848 = vsub.f32 %v1676, %v1839
      %v1849 = vsub.f32 %v1677, %v1843
      %v1850 = vsub.f32 %v1678, %v1839
      %v1851 = vsub.f32 %v1679, %v1843
      %v1852 = vsub.f32 %v1680, %v1839
      %v1853 = vsub.f32 %v1681, %v1843
      %v1854 = vsub.f32 %v1682, %v1839
      %v1855 = vsub.f32 %v1683, %v1843
      %v1856 = vsub.f32 %v1684, %v1839
      %v1857 = vsub.f32 %v1685, %v1843
      %v1858 = vsub.f32 %v1686, %v1839
      %v1859 = vsub.f32 %v1687, %v1843
      %v1860 = vsub.f32 %v1688, %v1839
      %v1861 = vsub.f32 %v1689, %v1843
      %v1862 = vsub.f32 %v1690, %v1839
      %v1863 = vsub.f32 %v1691, %v1843
      %v1864 = vsub.f32 %v1692, %v1839
      %v1865 = vsub.f32 %v1693, %v1843
      %v1866 = vsub.f32 %v1694, %v1839
      %v1867 = vsub.f32 %v1695, %v1843
      %v1868 = vsub.f32 %v1696, %v1839
      %v1869 = vsub.f32 %v1697, %v1843
      %v1870 = vsub.f32 %v1698, %v1839
      %v1871 = vsub.f32 %v1699, %v1843
      %v1872 = vsub.f32 %v1700, %v1839
      %v1873 = vsub.f32 %v1701, %v1843
      %v1874 = vsub.f32 %v1702, %v1839
      %v1875 = vsub.f32 %v1703, %v1843
      %v1876 = vsub.f32 %v1704, %v1839
      %v1877 = vsub.f32 %v1705, %v1843
      %v1878 = vsub.f32 %v1706, %v1839
      %v1879 = vsub.f32 %v1707, %v1843
      %v1880 = vsub.f32 %v1708, %v1839
      %v1881 = vsub.f32 %v1709, %v1843
      %v1882 = vsub.f32 %v1710, %v1839
      %v1883 = vsub.f32 %v1711, %v1843
      %v1884 = vsub.f32 %v1712, %v1839
      %v1885 = vsub.f32 %v1713, %v1843
      %v1886 = vsub.f32 %v1714, %v1839
      %v1887 = vsub.f32 %v1715, %v1843
      %v1888 = vsub.f32 %v1716, %v1839
      %v1889 = vsub.f32 %v1717, %v1843
      %v1890 = vsub.f32 %v1718, %v1839
      %v1891 = vsub.f32 %v1719, %v1843
      %v1892 = vsub.f32 %v1720, %v1839
      %v1893 = vsub.f32 %v1721, %v1843
      %v1894 = vsub.f32 %v1722, %v1839
      %v1895 = vsub.f32 %v1723, %v1843
      %v1896 = vsub.f32 %v1724, %v1839
      %v1897 = vsub.f32 %v1725, %v1843
      %v1898 = vsub.f32 %v1726, %v1839
      %v1899 = vsub.f32 %v1727, %v1843
      %v1900 = vsub.f32 %v1728, %v1839
      %v1901 = vsub.f32 %v1729, %v1843
      %v1902 = vsub.f32 %v1730, %v1839
      %v1903 = vsub.f32 %v1731, %v1843
      %v1904 = vsub.f32 %v1732, %v1839
      %v1905 = vsub.f32 %v1733, %v1843
      %v1906 = vsub.f32 %v1734, %v1839
      %v1907 = vsub.f32 %v1735, %v1843
      %v1908 = vsub.f32 %v1736, %v1839
      %v1909 = vsub.f32 %v1737, %v1843
      %v1910 = vmul.f32 %v1846, 1.442695
      %v1911 = vpow.pop %v1910
      %v1912 = vmul.f32 %v1847, 1.442695
      %v1913 = vpow.pop %v1912
      %v1914 = vmul.f32 %v1848, 1.442695
      %v1915 = vpow.pop %v1914
      %v1916 = vmul.f32 %v1849, 1.442695
      %v1917 = vpow.pop %v1916
      %v1918 = vmul.f32 %v1850, 1.442695
      %v1919 = vpow.pop %v1918
      %v1920 = vmul.f32 %v1851, 1.442695
      %v1921 = vpow.pop %v1920
      %v1922 = vmul.f32 %v1852, 1.442695
      %v1923 = vpow.pop %v1922
      %v1924 = vmul.f32 %v1853, 1.442695
      %v1925 = vpow.pop %v1924
      %v1926 = vmul.f32 %v1854, 1.442695
      %v1927 = vpow.pop %v1926
      %v1928 = vmul.f32 %v1855, 1.442695
      %v1929 = vpow.pop %v1928
      %v1930 = vmul.f32 %v1856, 1.442695
      %v1931 = vpow.pop %v1930
      %v1932 = vmul.f32 %v1857, 1.442695
      %v1933 = vpow.pop %v1932
      %v1934 = vmul.f32 %v1858, 1.442695
      %v1935 = vpow.pop %v1934
      %v1936 = vmul.f32 %v1859, 1.442695
      %v1937 = vpow.pop %v1936
      %v1938 = vmul.f32 %v1860, 1.442695
      %v1939 = vpow.pop %v1938
      %v1940 = vmul.f32 %v1861, 1.442695
      %v1941 = vpow.pop %v1940
      %v1942 = vmul.f32 %v1862, 1.442695
      %v1943 = vpow.pop %v1942
      %v1944 = vmul.f32 %v1863, 1.442695
      %v1945 = vpow.pop %v1944
      %v1946 = vmul.f32 %v1864, 1.442695
      %v1947 = vpow.pop %v1946
      %v1948 = vmul.f32 %v1865, 1.442695
      %v1949 = vpow.pop %v1948
      %v1950 = vmul.f32 %v1866, 1.442695
      %v1951 = vpow.pop %v1950
      %v1952 = vmul.f32 %v1867, 1.442695
      %v1953 = vpow.pop %v1952
      %v1954 = vmul.f32 %v1868, 1.442695
      %v1955 = vpow.pop %v1954
      %v1956 = vmul.f32 %v1869, 1.442695
      %v1957 = vpow.pop %v1956
      %v1958 = vmul.f32 %v1870, 1.442695
      %v1959 = vpow.pop %v1958
      %v1960 = vmul.f32 %v1871, 1.442695
      %v1961 = vpow.pop %v1960
      %v1962 = vmul.f32 %v1872, 1.442695
      %v1963 = vpow.pop %v1962
      %v1964 = vmul.f32 %v1873, 1.442695
      %v1965 = vpow.pop %v1964
      %v1966 = vmul.f32 %v1874, 1.442695
      %v1967 = vpow.pop %v1966
      %v1968 = vmul.f32 %v1875, 1.442695
      %v1969 = vpow.pop %v1968
      %v1970 = vmul.f32 %v1876, 1.442695
      %v1971 = vpow.pop %v1970
      %v1972 = vmul.f32 %v1877, 1.442695
      %v1973 = vpow.pop %v1972
      %v1974 = vmul.f32 %v1878, 1.442695
      %v1975 = vpow.pop %v1974
      %v1976 = vmul.f32 %v1879, 1.442695
      %v1977 = vpow.pop %v1976
      %v1978 = vmul.f32 %v1880, 1.442695
      %v1979 = vpow.pop %v1978
      %v1980 = vmul.f32 %v1881, 1.442695
      %v1981 = vpow.pop %v1980
      %v1982 = vmul.f32 %v1882, 1.442695
      %v1983 = vpow.pop %v1982
      %v1984 = vmul.f32 %v1883, 1.442695
      %v1985 = vpow.pop %v1984
      %v1986 = vmul.f32 %v1884, 1.442695
      %v1987 = vpow.pop %v1986
      %v1988 = vmul.f32 %v1885, 1.442695
      %v1989 = vpow.pop %v1988
      %v1990 = vmul.f32 %v1886, 1.442695
      %v1991 = vpow.pop %v1990
      %v1992 = vmul.f32 %v1887, 1.442695
      %v1993 = vpow.pop %v1992
      %v1994 = vmul.f32 %v1888, 1.442695
      %v1995 = vpow.pop %v1994
      %v1996 = vmul.f32 %v1889, 1.442695
      %v1997 = vpow.pop %v1996
      %v1998 = vmul.f32 %v1890, 1.442695
      %v1999 = vpow.pop %v1998
      %v2000 = vmul.f32 %v1891, 1.442695
      %v2001 = vpow.pop %v2000
      %v2002 = vmul.f32 %v1892, 1.442695
      %v2003 = vpow.pop %v2002
      %v2004 = vmul.f32 %v1893, 1.442695
      %v2005 = vpow.pop %v2004
      %v2006 = vmul.f32 %v1894, 1.442695
      %v2007 = vpow.pop %v2006
      %v2008 = vmul.f32 %v1895, 1.442695
      %v2009 = vpow.pop %v2008
      %v2010 = vmul.f32 %v1896, 1.442695
      %v2011 = vpow.pop %v2010
      %v2012 = vmul.f32 %v1897, 1.442695
      %v2013 = vpow.pop %v2012
      %v2014 = vmul.f32 %v1898, 1.442695
      %v2015 = vpow.pop %v2014
      %v2016 = vmul.f32 %v1899, 1.442695
      %v2017 = vpow.pop %v2016
      %v2018 = vmul.f32 %v1900, 1.442695
      %v2019 = vpow.pop %v2018
      %v2020 = vmul.f32 %v1901, 1.442695
      %v2021 = vpow.pop %v2020
      %v2022 = vmul.f32 %v1902, 1.442695
      %v2023 = vpow.pop %v2022
      %v2024 = vmul.f32 %v1903, 1.442695
      %v2025 = vpow.pop %v2024
      %v2026 = vmul.f32 %v1904, 1.442695
      %v2027 = vpow.pop %v2026
      %v2028 = vmul.f32 %v1905, 1.442695
      %v2029 = vpow.pop %v2028
      %v2030 = vmul.f32 %v1906, 1.442695
      %v2031 = vpow.pop %v2030
      %v2032 = vmul.f32 %v1907, 1.442695
      %v2033 = vpow.pop %v2032
      %v2034 = vmul.f32 %v1908, 1.442695
      %v2035 = vpow.pop %v2034
      %v2036 = vmul.f32 %v1909, 1.442695
      %v2037 = vpow.pop %v2036
      %2038 = vset.pattern.permute.xlu0 5
      %2039 = vperm.xlu0 %2038, %v308
      %v2040 = vpop.permute.xlu0 %2039
      %2042 = vset.pattern.permute.xlu0 5
      %2043 = vperm.xlu0 %2042, %v309
      %v2044 = vpop.permute.xlu0 %2043
      %2046 = vset.pattern.permute.xlu0 5
      %2047 = vperm.xlu0 %2046, %v310
      %v2048 = vpop.permute.xlu0 %2047
      %2050 = vset.pattern.permute.xlu0 5
      %2051 = vperm.xlu0 %2050, %v311
      %v2052 = vpop.permute.xlu0 %2051
      %2054 = vset.pattern.permute.xlu0 5
      %2055 = vperm.xlu0 %2054, %v312
      %v2056 = vpop.permute.xlu0 %2055
      %2058 = vset.pattern.permute.xlu0 5
      %2059 = vperm.xlu0 %2058, %v313
      %v2060 = vpop.permute.xlu0 %2059
      %2062 = vset.pattern.permute.xlu0 5
      %2063 = vperm.xlu0 %2062, %v314
      %v2064 = vpop.permute.xlu0 %2063
      %2066 = vset.pattern.permute.xlu0 5
      %2067 = vperm.xlu0 %2066, %v315
      %v2068 = vpop.permute.xlu0 %2067
      %2070 = vset.pattern.permute.xlu0 5
      %2071 = vperm.xlu0 %2070, %v316
      %v2072 = vpop.permute.xlu0 %2071
      %2074 = vset.pattern.permute.xlu0 5
      %2075 = vperm.xlu0 %2074, %v317
      %v2076 = vpop.permute.xlu0 %2075
      %2078 = vset.pattern.permute.xlu0 5
      %2079 = vperm.xlu0 %2078, %v318
      %v2080 = vpop.permute.xlu0 %2079
      %2082 = vset.pattern.permute.xlu0 5
      %2083 = vperm.xlu0 %2082, %v319
      %v2084 = vpop.permute.xlu0 %2083
      %2086 = vset.pattern.permute.xlu0 5
      %2087 = vperm.xlu0 %2086, %v320
      %v2088 = vpop.permute.xlu0 %2087
      %2090 = vset.pattern.permute.xlu0 5
      %2091 = vperm.xlu0 %2090, %v321
      %v2092 = vpop.permute.xlu0 %2091
      %2094 = vset.pattern.permute.xlu0 5
      %2095 = vperm.xlu0 %2094, %v322
      %v2096 = vpop.permute.xlu0 %2095
      %2098 = vset.pattern.permute.xlu0 5
      %2099 = vperm.xlu0 %2098, %v323
      %v2100 = vpop.permute.xlu0 %2099
      %2102 = vset.pattern.permute.xlu0 5
      %2103 = vperm.xlu0 %2102, %v324
      %v2104 = vpop.permute.xlu0 %2103
      %2106 = vset.pattern.permute.xlu0 5
      %2107 = vperm.xlu0 %2106, %v325
      %v2108 = vpop.permute.xlu0 %2107
      %2110 = vset.pattern.permute.xlu0 5
      %2111 = vperm.xlu0 %2110, %v326
      %v2112 = vpop.permute.xlu0 %2111
      %2114 = vset.pattern.permute.xlu0 5
      %2115 = vperm.xlu0 %2114, %v327
      %v2116 = vpop.permute.xlu0 %2115
      %2118 = vset.pattern.permute.xlu0 5
      %2119 = vperm.xlu0 %2118, %v328
      %v2120 = vpop.permute.xlu0 %2119
      %2122 = vset.pattern.permute.xlu0 5
      %2123 = vperm.xlu0 %2122, %v329
      %v2124 = vpop.permute.xlu0 %2123
      %2126 = vset.pattern.permute.xlu0 5
      %2127 = vperm.xlu0 %2126, %v330
      %v2128 = vpop.permute.xlu0 %2127
      %2130 = vset.pattern.permute.xlu0 5
      %2131 = vperm.xlu0 %2130, %v331
      %v2132 = vpop.permute.xlu0 %2131
      %2134 = vset.pattern.permute.xlu0 5
      %2135 = vperm.xlu0 %2134, %v332
      %v2136 = vpop.permute.xlu0 %2135
      %2138 = vset.pattern.permute.xlu0 5
      %2139 = vperm.xlu0 %2138, %v333
      %v2140 = vpop.permute.xlu0 %2139
      %2142 = vset.pattern.permute.xlu0 5
      %2143 = vperm.xlu0 %2142, %v334
      %v2144 = vpop.permute.xlu0 %2143
      %2146 = vset.pattern.permute.xlu0 5
      %2147 = vperm.xlu0 %2146, %v335
      %v2148 = vpop.permute.xlu0 %2147
      %2150 = vset.pattern.permute.xlu0 5
      %2151 = vperm.xlu0 %2150, %v336
      %v2152 = vpop.permute.xlu0 %2151
      %2154 = vset.pattern.permute.xlu0 5
      %2155 = vperm.xlu0 %2154, %v337
      %v2156 = vpop.permute.xlu0 %2155
      %2158 = vset.pattern.permute.xlu0 5
      %2159 = vperm.xlu0 %2158, %v338
      %v2160 = vpop.permute.xlu0 %2159
      %2162 = vset.pattern.permute.xlu0 5
      %2163 = vperm.xlu0 %2162, %v339
      %v2164 = vpop.permute.xlu0 %2163
      %v2166 = vmul.f32 %v2040, %v1418
      %v2167 = vmul.f32 %v2040, %v1419
      %v2168 = vmul.f32 %v2044, %v1420
      %v2169 = vmul.f32 %v2044, %v1421
      %v2170 = vmul.f32 %v2048, %v1422
      %v2171 = vmul.f32 %v2048, %v1423
      %v2172 = vmul.f32 %v2052, %v1424
      %v2173 = vmul.f32 %v2052, %v1425
      %v2174 = vmul.f32 %v2056, %v1426
      %v2175 = vmul.f32 %v2056, %v1427
      %v2176 = vmul.f32 %v2060, %v1428
      %v2177 = vmul.f32 %v2060, %v1429
      %v2178 = vmul.f32 %v2064, %v1430
      %v2179 = vmul.f32 %v2064, %v1431
      %v2180 = vmul.f32 %v2068, %v1432
      %v2181 = vmul.f32 %v2068, %v1433
      %v2182 = vmul.f32 %v2072, %v1434
      %v2183 = vmul.f32 %v2072, %v1435
      %v2184 = vmul.f32 %v2076, %v1436
      %v2185 = vmul.f32 %v2076, %v1437
      %v2186 = vmul.f32 %v2080, %v1438
      %v2187 = vmul.f32 %v2080, %v1439
      %v2188 = vmul.f32 %v2084, %v1440
      %v2189 = vmul.f32 %v2084, %v1441
      %v2190 = vmul.f32 %v2088, %v1442
      %v2191 = vmul.f32 %v2088, %v1443
      %v2192 = vmul.f32 %v2092, %v1444
      %v2193 = vmul.f32 %v2092, %v1445
      %v2194 = vmul.f32 %v2096, %v1446
      %v2195 = vmul.f32 %v2096, %v1447
      %v2196 = vmul.f32 %v2100, %v1448
      %v2197 = vmul.f32 %v2100, %v1449
      %v2198 = vmul.f32 %v2104, %v1450
      %v2199 = vmul.f32 %v2104, %v1451
      %v2200 = vmul.f32 %v2108, %v1452
      %v2201 = vmul.f32 %v2108, %v1453
      %v2202 = vmul.f32 %v2112, %v1454
      %v2203 = vmul.f32 %v2112, %v1455
      %v2204 = vmul.f32 %v2116, %v1456
      %v2205 = vmul.f32 %v2116, %v1457
      %v2206 = vmul.f32 %v2120, %v1458
      %v2207 = vmul.f32 %v2120, %v1459
      %v2208 = vmul.f32 %v2124, %v1460
      %v2209 = vmul.f32 %v2124, %v1461
      %v2210 = vmul.f32 %v2128, %v1462
      %v2211 = vmul.f32 %v2128, %v1463
      %v2212 = vmul.f32 %v2132, %v1464
      %v2213 = vmul.f32 %v2132, %v1465
      %v2214 = vmul.f32 %v2136, %v1466
      %v2215 = vmul.f32 %v2136, %v1467
      %v2216 = vmul.f32 %v2140, %v1468
      %v2217 = vmul.f32 %v2140, %v1469
      %v2218 = vmul.f32 %v2144, %v1470
      %v2219 = vmul.f32 %v2144, %v1471
      %v2220 = vmul.f32 %v2148, %v1472
      %v2221 = vmul.f32 %v2148, %v1473
      %v2222 = vmul.f32 %v2152, %v1474
      %v2223 = vmul.f32 %v2152, %v1475
      %v2224 = vmul.f32 %v2156, %v1476
      %v2225 = vmul.f32 %v2156, %v1477
      %v2226 = vmul.f32 %v2160, %v1478
      %v2227 = vmul.f32 %v2160, %v1479
      %v2228 = vmul.f32 %v2164, %v1480
      %v2229 = vmul.f32 %v2164, %v1481
      %v2230 = vmul.f32 %v1911, %v2166
      %v2231 = vmul.f32 %v1913, %v2167
      %v2232 = vmul.f32 %v1915, %v2168
      %v2233 = vmul.f32 %v1917, %v2169
      %v2234 = vmul.f32 %v1919, %v2170
      %v2235 = vmul.f32 %v1921, %v2171
      %v2236 = vmul.f32 %v1923, %v2172
      %v2237 = vmul.f32 %v1925, %v2173
      %v2238 = vmul.f32 %v1927, %v2174
      %v2239 = vmul.f32 %v1929, %v2175
      %v2240 = vmul.f32 %v1931, %v2176
      %v2241 = vmul.f32 %v1933, %v2177
      %v2242 = vmul.f32 %v1935, %v2178
      %v2243 = vmul.f32 %v1937, %v2179
      %v2244 = vmul.f32 %v1939, %v2180
      %v2245 = vmul.f32 %v1941, %v2181
      %v2246 = vmul.f32 %v1943, %v2182
      %v2247 = vmul.f32 %v1945, %v2183
      %v2248 = vmul.f32 %v1947, %v2184
      %v2249 = vmul.f32 %v1949, %v2185
      %v2250 = vmul.f32 %v1951, %v2186
      %v2251 = vmul.f32 %v1953, %v2187
      %v2252 = vmul.f32 %v1955, %v2188
      %v2253 = vmul.f32 %v1957, %v2189
      %v2254 = vmul.f32 %v1959, %v2190
      %v2255 = vmul.f32 %v1961, %v2191
      %v2256 = vmul.f32 %v1963, %v2192
      %v2257 = vmul.f32 %v1965, %v2193
      %v2258 = vmul.f32 %v1967, %v2194
      %v2259 = vmul.f32 %v1969, %v2195
      %v2260 = vmul.f32 %v1971, %v2196
      %v2261 = vmul.f32 %v1973, %v2197
      %v2262 = vmul.f32 %v1975, %v2198
      %v2263 = vmul.f32 %v1977, %v2199
      %v2264 = vmul.f32 %v1979, %v2200
      %v2265 = vmul.f32 %v1981, %v2201
      %v2266 = vmul.f32 %v1983, %v2202
      %v2267 = vmul.f32 %v1985, %v2203
      %v2268 = vmul.f32 %v1987, %v2204
      %v2269 = vmul.f32 %v1989, %v2205
      %v2270 = vmul.f32 %v1991, %v2206
      %v2271 = vmul.f32 %v1993, %v2207
      %v2272 = vmul.f32 %v1995, %v2208
      %v2273 = vmul.f32 %v1997, %v2209
      %v2274 = vmul.f32 %v1999, %v2210
      %v2275 = vmul.f32 %v2001, %v2211
      %v2276 = vmul.f32 %v2003, %v2212
      %v2277 = vmul.f32 %v2005, %v2213
      %v2278 = vmul.f32 %v2007, %v2214
      %v2279 = vmul.f32 %v2009, %v2215
      %v2280 = vmul.f32 %v2011, %v2216
      %v2281 = vmul.f32 %v2013, %v2217
      %v2282 = vmul.f32 %v2015, %v2218
      %v2283 = vmul.f32 %v2017, %v2219
      %v2284 = vmul.f32 %v2019, %v2220
      %v2285 = vmul.f32 %v2021, %v2221
      %v2286 = vmul.f32 %v2023, %v2222
      %v2287 = vmul.f32 %v2025, %v2223
      %v2288 = vmul.f32 %v2027, %v2224
      %v2289 = vmul.f32 %v2029, %v2225
      %v2290 = vmul.f32 %v2031, %v2226
      %v2291 = vmul.f32 %v2033, %v2227
      %v2292 = vmul.f32 %v2035, %v2228
      %v2293 = vmul.f32 %v2037, %v2229
      %v2294 = vld [vmem:[#allocation3] sm:$0x3]
      %v2295 = vmul.f32 %v1834, %v2294
      %v2296 = vadd.f32 %v2230, %v2232
      %v2297 = vadd.f32 %v2296, %v2234
      %v2298 = vadd.f32 %v2297, %v2236
      %v2299 = vadd.f32 %v2298, %v2238
      %v2300 = vadd.f32 %v2299, %v2240
      %v2301 = vadd.f32 %v2300, %v2242
      %v2302 = vadd.f32 %v2301, %v2244
      %v2303 = vadd.f32 %v2302, %v2246
      %v2304 = vadd.f32 %v2303, %v2248
      %v2305 = vadd.f32 %v2304, %v2250
      %v2306 = vadd.f32 %v2305, %v2252
      %v2307 = vadd.f32 %v2306, %v2254
      %v2308 = vadd.f32 %v2307, %v2256
      %v2309 = vadd.f32 %v2308, %v2258
      %v2310 = vadd.f32 %v2309, %v2260
      %v2311 = vadd.f32 %v2310, %v2262
      %v2312 = vadd.f32 %v2311, %v2264
      %v2313 = vadd.f32 %v2312, %v2266
      %v2314 = vadd.f32 %v2313, %v2268
      %v2315 = vadd.f32 %v2314, %v2270
      %v2316 = vadd.f32 %v2315, %v2272
      %v2317 = vadd.f32 %v2316, %v2274
      %v2318 = vadd.f32 %v2317, %v2276
      %v2319 = vadd.f32 %v2318, %v2278
      %v2320 = vadd.f32 %v2319, %v2280
      %v2321 = vadd.f32 %v2320, %v2282
      %v2322 = vadd.f32 %v2321, %v2284
      %v2323 = vadd.f32 %v2322, %v2286
      %v2324 = vadd.f32 %v2323, %v2288
      %v2325 = vadd.f32 %v2324, %v2290
      %v2326 = vadd.f32 %v2325, %v2292
      %v2327 = vrot.slane %v2326, 4
      %v2328 = vadd.f32 %v2326, %v2327
      %v2329 = vrot.slane %v2328, 2
      %v2330 = vadd.f32 %v2328, %v2329
      %v2331 = vrot.slane %v2330, 1
      %v2332 = vadd.f32 %v2330, %v2331
      %v2333 = vadd.f32 %v2231, %v2233
      %v2334 = vadd.f32 %v2333, %v2235
      %v2335 = vadd.f32 %v2334, %v2237
      %v2336 = vadd.f32 %v2335, %v2239
      %v2337 = vadd.f32 %v2336, %v2241
      %v2338 = vadd.f32 %v2337, %v2243
      %v2339 = vadd.f32 %v2338, %v2245
      %v2340 = vadd.f32 %v2339, %v2247
      %v2341 = vadd.f32 %v2340, %v2249
      %v2342 = vadd.f32 %v2341, %v2251
      %v2343 = vadd.f32 %v2342, %v2253
      %v2344 = vadd.f32 %v2343, %v2255
      %v2345 = vadd.f32 %v2344, %v2257
      %v2346 = vadd.f32 %v2345, %v2259
      %v2347 = vadd.f32 %v2346, %v2261
      %v2348 = vadd.f32 %v2347, %v2263
      %v2349 = vadd.f32 %v2348, %v2265
      %v2350 = vadd.f32 %v2349, %v2267
      %v2351 = vadd.f32 %v2350, %v2269
      %v2352 = vadd.f32 %v2351, %v2271
      %v2353 = vadd.f32 %v2352, %v2273
      %v2354 = vadd.f32 %v2353, %v2275
      %v2355 = vadd.f32 %v2354, %v2277
      %v2356 = vadd.f32 %v2355, %v2279
      %v2357 = vadd.f32 %v2356, %v2281
      %v2358 = vadd.f32 %v2357, %v2283
      %v2359 = vadd.f32 %v2358, %v2285
      %v2360 = vadd.f32 %v2359, %v2287
      %v2361 = vadd.f32 %v2360, %v2289
      %v2362 = vadd.f32 %v2361, %v2291
      %v2363 = vadd.f32 %v2362, %v2293
      %v2364 = vrot.slane %v2363, 4
      %v2365 = vadd.f32 %v2363, %v2364
      %v2366 = vrot.slane %v2365, 2
      %v2367 = vadd.f32 %v2365, %v2366
      %v2368 = vrot.slane %v2367, 1
      %v2369 = vadd.f32 %v2367, %v2368
      %v2372 = vcombine.low %v2332, %v2369
      %v2374 = vunpack.c.l.s4 1966171168
      %v2375 = vunpack.c.0.s8 %v2374
      %v2376 = vlaneseq
      %v2377 = vshrl.u32 %v2376, 7
      %v2378 = vsub.s32 %v2375, %v2377
      %v2379 = vrot.slane %v2372, %v2378
      %v2381 = vunpack.c.l.s4 1966171168
      %v2382 = vunpack.c.0.s8 %v2381
      %v2383 = vlaneseq
      %v2384 = vshrl.u32 %v2383, 7
      %v2385 = vsub.s32 %v2382, %v2384
      %v2386 = vrot.slane %v2379, %v2385
      %v2388 = vadd.f32 %v2295, %v2386
      %v2389 = vlaneseq
      %vm2390 = vcmp.ge.s32.totalorder %v2389, 0
      %vm2391 = vcmp.lt.s32.totalorder %v2389, 256
      %vm2392 = vmand %vm2390, %vm2391
      %2393 = vst.msk [vmem:[#allocation3] sm:$0x3] %vm2392, %v2388
      %v2394 = vld [vmem:[#allocation4] sm:$0x77]
      %v2396 = vlaneseq
      %v2397 = vshrl.u32 %v2396, 7
      %v2398 = vsub.s32 0, %v2397
      %v2399 = vrot.slane %v1834, %v2398
      %v2400 = vlaneseq
      %v2401 = vshrl.u32 %v2400, 7
      %v2402 = vsub.s32 1, %v2401
      %v2403 = vrot.slane %v1834, %v2402
      %v2407 = vcombine.high %v2394, %v2394
      %v2409 = vmul.f32 %v2399, %v2394
      %v2410 = vmul.f32 %v2403, %v2407
      %v2411 = vld [vmem:[%s280] sm:$0xf]
      %v2412 = vpack.c.bf16 %v2232, %v2230
      %v2413 = vpack.c.bf16 %v2233, %v2231
      %v2414 = vpack.c.bf16 %v2236, %v2234
      %v2415 = vpack.c.bf16 %v2237, %v2235
      %v2416 = vpack.c.bf16 %v2240, %v2238
      %v2417 = vpack.c.bf16 %v2241, %v2239
      %v2418 = vpack.c.bf16 %v2244, %v2242
      %v2419 = vpack.c.bf16 %v2245, %v2243
      %v2420 = vpack.c.bf16 %v2248, %v2246
      %v2421 = vpack.c.bf16 %v2249, %v2247
      %v2422 = vpack.c.bf16 %v2252, %v2250
      %v2423 = vpack.c.bf16 %v2253, %v2251
      %v2424 = vpack.c.bf16 %v2256, %v2254
      %v2425 = vpack.c.bf16 %v2257, %v2255
      %v2426 = vpack.c.bf16 %v2260, %v2258
      %v2427 = vpack.c.bf16 %v2261, %v2259
      %v2428 = vpack.c.bf16 %v2264, %v2262
      %v2429 = vpack.c.bf16 %v2265, %v2263
      %v2430 = vpack.c.bf16 %v2268, %v2266
      %v2431 = vpack.c.bf16 %v2269, %v2267
      %v2432 = vpack.c.bf16 %v2272, %v2270
      %v2433 = vpack.c.bf16 %v2273, %v2271
      %v2434 = vpack.c.bf16 %v2276, %v2274
      %v2435 = vpack.c.bf16 %v2277, %v2275
      %v2436 = vpack.c.bf16 %v2280, %v2278
      %v2437 = vpack.c.bf16 %v2281, %v2279
      %v2438 = vpack.c.bf16 %v2284, %v2282
      %v2439 = vpack.c.bf16 %v2285, %v2283
      %v2440 = vpack.c.bf16 %v2288, %v2286
      %v2441 = vpack.c.bf16 %v2289, %v2287
      %v2442 = vpack.c.bf16 %v2292, %v2290
      %v2443 = vpack.c.bf16 %v2293, %v2291
      %v2446 = vunpack.c.l.s4 1983009808
      %v2447 = vunpack.c.0.s8 %v2446
      %v2448 = vlaneseq
      %v2449 = vshrl.u32 %v2448, 7
      %v2450 = vsub.s32 %v2447, %v2449
      %v2451 = vrot.slane %v2411, %v2450
      %v2452 = vcombine.high %v2451, %v2451
      %2455 = vmatprep.subr.bf16.mxu0 %v2427
      %2456 = vmatpush1.bf16.msra.mxu0 %v2426
      %2457 = vmatprep.subr.bf16.mxu0 %v2425
      %2458 = vmatpush1.bf16.msra.mxu0 %v2424
      %2459 = vmatprep.subr.bf16.mxu0 %v2423
      %2460 = vmatpush1.bf16.msra.mxu0 %v2422
      %2461 = vmatprep.subr.bf16.mxu0 %v2421
      %2462 = vmatpush1.bf16.msra.mxu0 %v2420
      %2463 = vmatprep.subr.bf16.mxu0 %v2419
      %2464 = vmatpush1.bf16.msra.mxu0 %v2418
      %2465 = vmatprep.subr.bf16.mxu0 %v2417
      %2466 = vmatpush1.bf16.msra.mxu0 %v2416
      %2467 = vmatprep.subr.bf16.mxu0 %v2415
      %2468 = vmatpush1.bf16.msra.mxu0 %v2414
      %2469 = vmatprep.subr.bf16.mxu0 %v2413
      %2470 = vmatpush1.bf16.msra.mxu0 %v2412
      %2471 = vmatprep.subr.bf16.mxu0 %v2443
      %2472 = vmatpush2.bf16.msra.mxu0 %v2442
      %2473 = vmatprep.subr.bf16.mxu0 %v2441
      %2474 = vmatpush2.bf16.msra.mxu0 %v2440
      %2475 = vmatprep.subr.bf16.mxu0 %v2439
      %2476 = vmatpush2.bf16.msra.mxu0 %v2438
      %2477 = vmatprep.subr.bf16.mxu0 %v2437
      %2478 = vmatpush2.bf16.msra.mxu0 %v2436
      %2479 = vmatprep.subr.bf16.mxu0 %v2435
      %2480 = vmatpush2.bf16.msra.mxu0 %v2434
      %2481 = vmatprep.subr.bf16.mxu0 %v2433
      %2482 = vmatpush2.bf16.msra.mxu0 %v2432
      %2483 = vmatprep.subr.bf16.mxu0 %v2431
      %2484 = vmatpush2.bf16.msra.mxu0 %v2430
      %2485 = vmatprep.subr.bf16.mxu0 %v2429
      %2486 = vmatpush2.bf16.msra.mxu0 %v2428
      %2487 = vmatprep.mubr.bf16.mxu0 %v2452
      %2488 = vmatmul.mubr.bf16.gmra.mxu0 %v2451
      %v2489 = vpop.f32.mrf.mxu0
      %v2490 = vadd.f32 0.0, %v2489
      %v2491 = vpop.f32.mrf.mxu0
      %v2492 = vadd.f32 0.0, %v2491
      %v2493 = vpop.f32.mrf.mxu0
      %v2494 = vpop.f32.mrf.mxu0
      %2495 = vdwg.mxu0
      %v2496 = vadd.f32 %v2409, %v2490
      %v2497 = vadd.f32 %v2410, %v2492
      %v2500 = vcombine.low %v2496, %v2497
      %2502 = vst [vmem:[#allocation4] sm:$0x77] %v2500
      %2503 = vst.msk [vmem:[#allocation2] sm:$0x3] %vm2392, %v1831
      %p2504 = scmp.eq.s32.totalorder %s23, 1
      // Predicated region
      $region37: #{tpu_custom_call.1} parent=31 // pred_check
        %p2505 = pneg %p2504
      $region38: #{tpu_custom_call.1} parent=31 // pred_check_branch
        %2507 = sbr.rel (%p2505) target = $region40
      $region39: #{tpu_custom_call.1} parent=31 // pred_region
        %v2508 = vld [vmem:[#allocation3] sm:$0x3]
        %v2509 = vmax.f32 %v2508, 1e-30
        %v2510 = vrcp.pop %v2509
        %v2511 = vld [vmem:[#allocation4] sm:$0x77]
        %v2513 = vlaneseq
        %v2514 = vshrl.u32 %v2513, 7
        %v2515 = vsub.s32 0, %v2514
        %v2516 = vrot.slane %v2510, %v2515
        %v2517 = vlaneseq
        %v2518 = vshrl.u32 %v2517, 7
        %v2519 = vsub.s32 1, %v2518
        %v2520 = vrot.slane %v2510, %v2519
        %v2521 = vcombine.low %v2516, %v2520
        %v2523 = vmul.f32 %v2511, %v2521
        %2524 = vst [vmem:[%s291] sm:$0x77] %v2523
      $region40: #{tpu_custom_call.1} parent=31 // pred_fallthru
        _
      %s2525 = sadd.s32 %s21, %s22
      %s2526 = smul.u32 2, %s2525
      %p2527 = scmp.lt.s32.totalorder %s20, 1
      %s2528 = scalar_select %p2527, %s20, 1
      %p2529 = scmp.lt.s32.totalorder %s2526, 1
      %s2530 = scalar_select %p2529, %s2526, 1
      %s2531 = smul.addr %s2528, 2
      %s2532 = sadd.s32 %s2530, %s2531
      %s2533 = smul.addr %s2532, 4
      %s2534 = scalar_lea.vmem %s3, %s2533
      // Predicated region
      $region41: #{tpu_custom_call.1} parent=31 // pred_check
        %p2535 = pneg %p146
      $region42: #{tpu_custom_call.1} parent=31 // pred_check_branch
        %2537 = sbr.rel (%p2535) target = $region44
      $region43: #{tpu_custom_call.1} parent=31 // pred_region
        %s2538 = sadd.s32 %s21, %s22
        %s2539 = smul.u32 2, %s2538
      $region44: #{tpu_custom_call.1} parent=31 // pred_fallthru
        _
    $region32: #{tpu_custom_call.1} parent=5 // pred_fallthru
      _
    %p2540 = scmp.le.s32.totalorder 2, %s9
    // Predicated region
    $region45: #{tpu_custom_call.1} parent=5 // pred_check
      %p2541 = pneg %p2540
    $region46: #{tpu_custom_call.1} parent=5 // pred_check_branch
      %2543 = sbr.rel (%p2541) target = $region48
    $region47: #{tpu_custom_call.1} parent=5 // pred_region
      %s2544 = ssub.s32 %s9, 2
      // Predicated region
      $region49: #{tpu_custom_call.1} parent=47 // pred_check
        %p2545 = pneg %p152
      $region50: #{tpu_custom_call.1} parent=47 // pred_check_branch
        %2547 = sbr.rel (%p2545) target = $region52
      $region51: #{tpu_custom_call.1} parent=47 // pred_region
        %s2548 = sadd.s32 %s25, %s26
        %s2549 = smul.u32 2, %s2548
        %p2550 = scmp.lt.s32.totalorder %s24, 1
        %s2551 = scalar_select %p2550, %s24, 1
        %p2552 = scmp.lt.s32.totalorder %s2549, 1
        %s2553 = scalar_select %p2552, %s2549, 1
        %s2554 = smul.addr %s2551, 2
        %s2555 = sadd.s32 %s2553, %s2554
        %s2556 = smul.addr %s2555, 4
        %s2557 = scalar_lea.vmem %s3, %s2556
      $region52: #{tpu_custom_call.1} parent=47 // pred_fallthru
        _
    $region48: #{tpu_custom_call.1} parent=5 // pred_fallthru
      _
  $region6: #{tpu_custom_call.1} parent=0 // loop_footer
    %s13 = sadd.s32 1, %s9
  $region7: #{tpu_custom_call.1} parent=0 // loop_footer_branch
    %8 = sbr.rel target = $region3
  $region8: #{tpu_custom_call.1} parent=0 // loop_exit
    _

</llo_original>
